<compile_context>
chip_gen: v5e
topology: v5e:2x2
jax: 0.10.0
libtpu: 0.0.40
codegen_flags: <defaults>
</compile_context>

<pallas_src>
import jax
import jax.numpy as jnp
from jax.experimental import pallas as pl
from jax.experimental.pallas import tpu as pltpu

# ---- Small, self-consistent config (scaled-down AHP/SCHP hyperparameters) ----
BATCH = 2
ENTITY_SIZE = 128          # entity_embeddings.shape[-2]
MAX_ENTITIES = 128         # AHP.max_entities (fc_3 output width) == ENTITY_SIZE
EMBED_SIZE = 32            # AHP.entity_embedding_size
ORIG_32 = 32               # AHP.original_32
AR_SIZE = 64               # AHP.autoregressive_embedding_size (scaled)
NUM_ACTIONS = 10
TEMPERATURE = 1.0          # is_sl_training=True -> temperature == 1.0

BP = 8                     # batch padded to the f32 sublane tile

# ---- Packed parameter slab layout (all offsets 8-row aligned) ----------------
OFF_W_FC3 = 0              # rows   0:128  fc_3 weight^T, rows 64:128 zero-padded
OFF_B_FC3 = 128            # rows 128:136  fc_3 bias, replicated over 8 rows
OFF_W_CONV = 136           # rows 136:168  conv_1 weight^T, lanes 32:128 zero
OFF_B_CONV = 168           # rows 168:176  conv_1 bias, replicated, lanes 32: zero
OFF_W_PROJ = 176           # rows 176:304  project weight^T, rows 32:/lanes 64: zero
OFF_B_PROJ = 304           # rows 304:312  project bias, replicated, lanes 64: zero
SLAB_ROWS = 312

# ---- Activation slab layout ---------------------------------------------------
ACT_AR = 0                 # rows  0:8   autoregressive embedding (lanes 0:64)
ACT_GUMBEL = 8             # rows  8:16  gumbel noise (lanes 0:128)
ACT_MASK = 16              # rows 16:24  select-unit mask broadcast over lanes
ACT_ROWS = 24


def _selected_units_kernel(act_ref, ent_ref, p_ref, out_ref):
    # --- unpack activation slab (all slices are 8-row aligned views) ---
    ar_pad = act_ref[ACT_AR:ACT_AR + BP, :]          # (8,128), lanes 64:128 zero
    gumbel = act_ref[ACT_GUMBEL:ACT_GUMBEL + BP, :]  # (8,128)
    sel_mask = act_ref[ACT_MASK:ACT_MASK + BP, :]    # (8,128)

    # --- entity_logits = fc_3(autoregressive_embedding) / temperature ---
    y = jnp.dot(ar_pad, p_ref[OFF_W_FC3:OFF_W_FC3 + 128, :],
                preferred_element_type=jnp.float32) + p_ref[OFF_B_FC3:OFF_B_FC3 + BP, :]
    entity_logits = y * (1.0 / TEMPERATURE)          # (8,128)

    # --- entity_id ~ multinomial(softmax(entity_logits), 1) via Gumbel-max ---
    z = entity_logits + gumbel
    zmax = jnp.max(z, axis=-1, keepdims=True)
    col = jax.lax.broadcasted_iota(jnp.int32, z.shape, 1)
    picked = jnp.min(jnp.where(z >= zmax, col, ENTITY_SIZE),
                     axis=-1, keepdims=True)          # (8,1) int32, lowest-index tie-break

    # --- gather the ONE selected entity embedding per batch (mask-and-sum) ---
    ecol = jax.lax.broadcasted_iota(jnp.int32, (BP, ENTITY_SIZE), 1)
    one_hot = (ecol == picked).astype(jnp.float32)                       # (8,128)
    sel = jnp.sum(ent_ref[...] * one_hot[:, :, None], axis=1)            # (8,32)

    # --- key = Conv1d(k=1) on the selected rows only (matmul over embed axis) ---
    key_sel = jnp.dot(sel, p_ref[OFF_W_CONV:OFF_W_CONV + EMBED_SIZE, :],
                      preferred_element_type=jnp.float32) \
        + p_ref[OFF_B_CONV:OFF_B_CONV + BP, :]                           # (8,128), valid lanes 0:32

    # --- mean-center (padded lanes are exactly zero, so sum/32 == true mean) ---
    mean = jnp.sum(key_sel, axis=-1, keepdims=True) * (1.0 / ORIG_32)
    centered = key_sel - mean                                            # garbage in lanes 32:128,
                                                                         # killed by zero rows of w_proj

    # --- project + gated residual update of the autoregressive embedding ---
    t = jnp.dot(centered, p_ref[OFF_W_PROJ:OFF_W_PROJ + 128, :],
                preferred_element_type=jnp.float32) \
        + p_ref[OFF_B_PROJ:OFF_B_PROJ + BP, :]                           # (8,128), valid lanes 0:64
    ar_new = ar_pad + t * sel_mask                                       # (8,128)

    # --- single lane-dense output slab: [logits | ar_new | sampled index] ---
    out_ref[:, 0:128] = entity_logits
    out_ref[:, 128:256] = ar_new
    out_ref[:, 256:384] = jnp.broadcast_to(picked.astype(jnp.float32), (BP, 128))


def make_params(key):
    ks = jax.random.split(key, 6)
    s = 0.05
    return dict(
        # Torch layouts: Linear [out, in]; Conv1d(k=1) [out, in] (kernel dim squeezed).
        w_conv=jax.random.normal(ks[0], (ORIG_32, EMBED_SIZE), jnp.float32) * s,
        b_conv=jax.random.normal(ks[1], (ORIG_32,), jnp.float32) * s,
        w_fc3=jax.random.normal(ks[2], (MAX_ENTITIES, AR_SIZE), jnp.float32) * s,
        b_fc3=jax.random.normal(ks[3], (MAX_ENTITIES,), jnp.float32) * s,
        w_proj=jax.random.normal(ks[4], (AR_SIZE, ORIG_32), jnp.float32) * s,
        b_proj=jax.random.normal(ks[5], (AR_SIZE,), jnp.float32) * s,
    )


def pack_params(params):
    """Pack all weights/biases (pre-transposed to [in, out]) into one f32 slab."""
    slab = jnp.zeros((SLAB_ROWS, 128), jnp.float32)
    slab = slab.at[OFF_W_FC3:OFF_W_FC3 + AR_SIZE, :MAX_ENTITIES].set(params["w_fc3"].T)
    slab = slab.at[OFF_B_FC3:OFF_B_FC3 + BP, :MAX_ENTITIES].set(
        jnp.broadcast_to(params["b_fc3"][None, :], (BP, MAX_ENTITIES)))
    slab = slab.at[OFF_W_CONV:OFF_W_CONV + EMBED_SIZE, :ORIG_32].set(params["w_conv"].T)
    slab = slab.at[OFF_B_CONV:OFF_B_CONV + BP, :ORIG_32].set(
        jnp.broadcast_to(params["b_conv"][None, :], (BP, ORIG_32)))
    slab = slab.at[OFF_W_PROJ:OFF_W_PROJ + ORIG_32, :AR_SIZE].set(params["w_proj"].T)
    slab = slab.at[OFF_B_PROJ:OFF_B_PROJ + BP, :AR_SIZE].set(
        jnp.broadcast_to(params["b_proj"][None, :], (BP, AR_SIZE)))
    return slab


def selected_units_head(params, select_mask_table, autoregressive_embedding,
                        action_type, entity_embeddings, rng_key):
    B, E, C = entity_embeddings.shape
    assert E == ENTITY_SIZE and C == EMBED_SIZE and B <= BP

    # L.action_involve_selecting_units_mask(action_type) (synthetic table lookup).
    sel_mask = select_mask_table[action_type[:, 0]].astype(jnp.float32)     # (B,)

    # torch.multinomial replacement: precomputed Gumbel noise (host-side RNG).
    gumbel = jax.random.gumbel(rng_key, (B, E), dtype=jnp.float32)

    # Activation slab: ar / gumbel / select-mask, batch padded to 8 rows.
    act = jnp.zeros((ACT_ROWS, 128), jnp.float32)
    act = act.at[ACT_AR:ACT_AR + B, 0:AR_SIZE].set(autoregressive_embedding)
    act = act.at[ACT_GUMBEL:ACT_GUMBEL + B, 0:E].set(gumbel)
    act = act.at[ACT_MASK:ACT_MASK + B, :].set(
        jnp.broadcast_to(sel_mask[:, None], (B, 128)))

    # Entity embeddings, batch padded to 8 (padding rows are zero).
    ent_pad = jnp.zeros((BP, E, C), jnp.float32).at[:B].set(entity_embeddings)

    p_slab = pack_params(params)

    out = pl.pallas_call(
        _selected_units_kernel,
        out_shape=jax.ShapeDtypeStruct((BP, 384), jnp.float32),
        grid=(1,),
        in_specs=[
            pl.BlockSpec((ACT_ROWS, 128), lambda i: (0, 0)),
            pl.BlockSpec((BP, E, C), lambda i: (0, 0, 0)),
            pl.BlockSpec((SLAB_ROWS, 128), lambda i: (0, 0)),
        ],
        out_specs=pl.BlockSpec((BP, 384), lambda i: (0, 0)),
        compiler_params=pltpu.CompilerParams(
            dimension_semantics=("arbitrary",),
            vmem_limit_bytes=4 * 1024 * 1024,
        ),
    )(act, ent_pad, p_slab)

    units_logits = out[:B, 0:E].reshape(B, 1, E)                 # [batch, max_selected(=1), entity]
    ar_new = out[:B, 128:128 + AR_SIZE]                          # [batch, ar_size]
    units = out[:B, 256].astype(jnp.int32).reshape(B, 1, 1)      # [batch, max_selected(=1), 1]
    return units_logits, units, ar_new


def _reference_forward(params, select_mask_table, ar, action_type, ent, rng_key):
    """Pure-JAX reference with the same Gumbel noise (same key) for checking."""
    B, E, _ = ent.shape
    sel_mask = select_mask_table[action_type[:, 0]].astype(jnp.float32)[:, None]
    gumbel = jax.random.gumbel(rng_key, (B, E), dtype=jnp.float32)
    logits = (ar @ params["w_fc3"].T + params["b_fc3"]) / TEMPERATURE
    picked = jnp.argmax(logits + gumbel, axis=-1)
    key_all = jnp.einsum("bec,oc->beo", ent, params["w_conv"]) + params["b_conv"]
    out = key_all[jnp.arange(B), picked]
    out = out - out.mean(axis=-1, keepdims=True)
    t = out @ params["w_proj"].T + params["b_proj"]
    ar_new = ar + t * sel_mask
    return logits, picked, ar_new


if __name__ == "__main__":
    key = jax.random.PRNGKey(0)
    k_params, k_ar, k_ent, k_sample = jax.random.split(key, 4)

    params = make_params(k_params)
    # Odd action ids involve selecting units (synthetic deterministic table).
    select_mask_table = (jnp.arange(NUM_ACTIONS) % 2).astype(jnp.float32)

    autoregressive_embedding = jax.random.normal(k_ar, (BATCH, AR_SIZE), jnp.float32)
    entity_embeddings = jax.random.normal(k_ent, (BATCH, ENTITY_SIZE, EMBED_SIZE), jnp.float32)
    action_type = jnp.array([[1], [2]], dtype=jnp.int32)

    units_logits, units, ar_new = selected_units_head(
        params, select_mask_table, autoregressive_embedding, action_type,
        entity_embeddings, k_sample)
    jax.block_until_ready((units_logits, units, ar_new))

    assert units_logits.shape == (BATCH, 1, ENTITY_SIZE)
    assert units.shape == (BATCH, 1, 1)
    assert ar_new.shape == (BATCH, AR_SIZE)

    ref_logits, ref_picked, ref_ar = _reference_forward(
        params, select_mask_table, autoregressive_embedding, action_type,
        entity_embeddings, k_sample)
    assert jnp.allclose(units_logits[:, 0, :], ref_logits, atol=1e-3, rtol=1e-3)
    assert jnp.array_equal(units[:, 0, 0], ref_picked.astype(jnp.int32))
    assert jnp.allclose(ar_new, ref_ar, atol=1e-3, rtol=1e-3)

    print("KERNEL_OK")
</pallas_src>

<mosaic_0001>
module attributes {stable_mosaic.version = 11 : i64} {
  func.func @_selected_units_kernel(%arg0: i32, %arg1: memref<24x128xf32, #tpu.memory_space<vmem>>, %arg2: memref<8x128x32xf32, #tpu.memory_space<vmem>>, %arg3: memref<312x128xf32, #tpu.memory_space<vmem>>, %arg4: memref<8x384xf32, #tpu.memory_space<vmem>>) attributes {dimension_semantics = [#tpu.dimension_semantics<arbitrary>], iteration_bounds = array<i64: 1>, scalar_prefetch = 0 : i64, scratch_operands = 0 : i64, tpu.core_type = #tpu.core_type<tc>, window_params = [{pipeline_mode = #tpu.pipeline_mode<synchronous>, transform_indices = @transform_0, window_bounds = array<i64: 24, 128>}, {pipeline_mode = #tpu.pipeline_mode<synchronous>, transform_indices = @transform_1, window_bounds = array<i64: 8, 128, 32>}, {pipeline_mode = #tpu.pipeline_mode<synchronous>, transform_indices = @transform_2, window_bounds = array<i64: 312, 128>}, {pipeline_mode = #tpu.pipeline_mode<synchronous>, transform_indices = @transform_3, window_bounds = array<i64: 8, 384>}]} {
    %c0 = arith.constant 0 : index
    %c0_0 = arith.constant 0 : index
    %0 = vector.load %arg1[%c0, %c0_0] : memref<24x128xf32, #tpu.memory_space<vmem>>, vector<8x128xf32>
    %c8 = arith.constant 8 : index
    %c0_1 = arith.constant 0 : index
    %1 = vector.load %arg1[%c8, %c0_1] : memref<24x128xf32, #tpu.memory_space<vmem>>, vector<8x128xf32>
    %c16 = arith.constant 16 : index
    %c0_2 = arith.constant 0 : index
    %2 = vector.load %arg1[%c16, %c0_2] : memref<24x128xf32, #tpu.memory_space<vmem>>, vector<8x128xf32>
    %c0_3 = arith.constant 0 : index
    %c0_4 = arith.constant 0 : index
    %3 = vector.load %arg3[%c0_3, %c0_4] : memref<312x128xf32, #tpu.memory_space<vmem>>, vector<128x128xf32>
    %cst = arith.constant dense<0.000000e+00> : vector<8x128xf32>
    %4 = tpu.matmul %0, %3, %cst {dimension_numbers = #tpu.dot_dimension_numbers<[1], [0], [0], [1], [0, 0, 1, 1], [], []>} : vector<8x128xf32>, vector<128x128xf32>, vector<8x128xf32> -> vector<8x128xf32>
    %c128 = arith.constant 128 : index
    %c0_5 = arith.constant 0 : index
    %5 = vector.load %arg3[%c128, %c0_5] : memref<312x128xf32, #tpu.memory_space<vmem>>, vector<8x128xf32>
    %6 = arith.addf %4, %5 : vector<8x128xf32>
    %cst_6 = arith.constant 1.000000e+00 : f32
    %7 = vector.broadcast %cst_6 : f32 to vector<8x128xf32>
    %8 = arith.mulf %6, %7 : vector<8x128xf32>
    %9 = arith.addf %8, %1 : vector<8x128xf32>
    %cst_7 = arith.constant dense<0xFF800000> : vector<8xf32>
    %10 = vector.multi_reduction <maximumf>, %9, %cst_7 [1] : vector<8x128xf32> to vector<8xf32>
    %11 = vector.shape_cast %10 : vector<8xf32> to vector<8x1xf32>
    %12 = tpu.iota {dimensions = array<i32: 1>} : vector<8x128xi32>
    %13 = vector.broadcast %11 : vector<8x1xf32> to vector<8x128xf32>
    %14 = arith.cmpf oge, %9, %13 : vector<8x128xf32>
    %c128_i32 = arith.constant 128 : i32
    %15 = vector.broadcast %c128_i32 : i32 to vector<8x128xi32>
    %16 = arith.select %14, %12, %15 : vector<8x128xi1>, vector<8x128xi32>
    %cst_8 = arith.constant dense<2147483647> : vector<8xi32>
    %17 = vector.multi_reduction <minsi>, %16, %cst_8 [1] : vector<8x128xi32> to vector<8xi32>
    %18 = vector.shape_cast %17 : vector<8xi32> to vector<8x1xi32>
    %19 = tpu.iota {dimensions = array<i32: 1>} : vector<8x128xi32>
    %20 = vector.broadcast %18 : vector<8x1xi32> to vector<8x128xi32>
    %21 = arith.cmpi eq, %19, %20 : vector<8x128xi32>
    %22 = arith.extui %21 : vector<8x128xi1> to vector<8x128xi32>
    %23 = arith.sitofp %22 : vector<8x128xi32> to vector<8x128xf32>
    %c0_9 = arith.constant 0 : index
    %c0_10 = arith.constant 0 : index
    %c0_11 = arith.constant 0 : index
    %24 = vector.load %arg2[%c0_9, %c0_10, %c0_11] : memref<8x128x32xf32, #tpu.memory_space<vmem>>, vector<8x128x32xf32>
    %25 = vector.shape_cast %23 : vector<8x128xf32> to vector<8x128x1xf32>
    %26 = vector.broadcast %25 : vector<8x128x1xf32> to vector<8x128x32xf32>
    %27 = arith.mulf %24, %26 : vector<8x128x32xf32>
    %cst_12 = arith.constant dense<0.000000e+00> : vector<8x32xf32>
    %28 = vector.multi_reduction <add>, %27, %cst_12 [1] : vector<8x128x32xf32> to vector<8x32xf32>
    %c136 = arith.constant 136 : index
    %c0_13 = arith.constant 0 : index
    %29 = vector.load %arg3[%c136, %c0_13] : memref<312x128xf32, #tpu.memory_space<vmem>>, vector<32x128xf32>
    %cst_14 = arith.constant dense<0.000000e+00> : vector<8x128xf32>
    %30 = tpu.matmul %28, %29, %cst_14 {dimension_numbers = #tpu.dot_dimension_numbers<[1], [0], [0], [1], [0, 0, 1, 1], [], []>} : vector<8x32xf32>, vector<32x128xf32>, vector<8x128xf32> -> vector<8x128xf32>
    %c168 = arith.constant 168 : index
    %c0_15 = arith.constant 0 : index
    %31 = vector.load %arg3[%c168, %c0_15] : memref<312x128xf32, #tpu.memory_space<vmem>>, vector<8x128xf32>
    %32 = arith.addf %30, %31 : vector<8x128xf32>
    %cst_16 = arith.constant dense<0.000000e+00> : vector<8xf32>
    %33 = vector.multi_reduction <add>, %32, %cst_16 [1] : vector<8x128xf32> to vector<8xf32>
    %34 = vector.shape_cast %33 : vector<8xf32> to vector<8x1xf32>
    %cst_17 = arith.constant 3.125000e-02 : f32
    %35 = vector.broadcast %cst_17 : f32 to vector<8x1xf32>
    %36 = arith.mulf %34, %35 : vector<8x1xf32>
    %37 = vector.broadcast %36 : vector<8x1xf32> to vector<8x128xf32>
    %38 = arith.subf %32, %37 : vector<8x128xf32>
    %c176 = arith.constant 176 : index
    %c0_18 = arith.constant 0 : index
    %39 = vector.load %arg3[%c176, %c0_18] : memref<312x128xf32, #tpu.memory_space<vmem>>, vector<128x128xf32>
    %cst_19 = arith.constant dense<0.000000e+00> : vector<8x128xf32>
    %40 = tpu.matmul %38, %39, %cst_19 {dimension_numbers = #tpu.dot_dimension_numbers<[1], [0], [0], [1], [0, 0, 1, 1], [], []>} : vector<8x128xf32>, vector<128x128xf32>, vector<8x128xf32> -> vector<8x128xf32>
    %c304 = arith.constant 304 : index
    %c0_20 = arith.constant 0 : index
    %41 = vector.load %arg3[%c304, %c0_20] : memref<312x128xf32, #tpu.memory_space<vmem>>, vector<8x128xf32>
    %42 = arith.addf %40, %41 : vector<8x128xf32>
    %43 = arith.mulf %42, %2 : vector<8x128xf32>
    %44 = arith.addf %0, %43 : vector<8x128xf32>
    %c0_21 = arith.constant 0 : index
    %c0_22 = arith.constant 0 : index
    %45 = vector.load %arg4[%c0_21, %c0_22] : memref<8x384xf32, #tpu.memory_space<vmem>>, vector<8x128xf32>
    tpu.vector_store %arg4[%c0_21, %c0_22], %8 {strides = array<i32>} : memref<8x384xf32, #tpu.memory_space<vmem>>, vector<8x128xf32>,
    %c0_23 = arith.constant 0 : index
    %c128_24 = arith.constant 128 : index
    %46 = vector.load %arg4[%c0_23, %c128_24] : memref<8x384xf32, #tpu.memory_space<vmem>>, vector<8x128xf32>
    tpu.vector_store %arg4[%c0_23, %c128_24], %44 {strides = array<i32>} : memref<8x384xf32, #tpu.memory_space<vmem>>, vector<8x128xf32>,
    %47 = arith.sitofp %18 : vector<8x1xi32> to vector<8x1xf32>
    %48 = vector.shape_cast %47 : vector<8x1xf32> to vector<8x1xf32>
    %49 = vector.broadcast %48 : vector<8x1xf32> to vector<8x128xf32>
    %c0_25 = arith.constant 0 : index
    %c256 = arith.constant 256 : index
    %50 = vector.load %arg4[%c0_25, %c256] : memref<8x384xf32, #tpu.memory_space<vmem>>, vector<8x128xf32>
    tpu.vector_store %arg4[%c0_25, %c256], %49 {strides = array<i32>} : memref<8x384xf32, #tpu.memory_space<vmem>>, vector<8x128xf32>,
    return
  }
  func.func @transform_0(%arg0: i32) -> (i32, i32) {
    %c0_i32 = arith.constant 0 : i32
    %c0_i32_0 = arith.constant 0 : i32
    %c0_i32_1 = arith.constant 0 : i32
    return %c0_i32, %c0_i32_0 : i32, i32
  }
  func.func @transform_1(%arg0: i32) -> (i32, i32, i32) {
    %c0_i32 = arith.constant 0 : i32
    %c0_i32_0 = arith.constant 0 : i32
    %c0_i32_1 = arith.constant 0 : i32
    %c0_i32_2 = arith.constant 0 : i32
    return %c0_i32, %c0_i32_0, %c0_i32_1 : i32, i32, i32
  }
  func.func @transform_2(%arg0: i32) -> (i32, i32) {
    %c0_i32 = arith.constant 0 : i32
    %c0_i32_0 = arith.constant 0 : i32
    %c0_i32_1 = arith.constant 0 : i32
    return %c0_i32, %c0_i32_0 : i32, i32
  }
  func.func @transform_3(%arg0: i32) -> (i32, i32) {
    %c0_i32 = arith.constant 0 : i32
    %c0_i32_0 = arith.constant 0 : i32
    %c0_i32_1 = arith.constant 0 : i32
    return %c0_i32, %c0_i32_0 : i32, i32
  }
}

</mosaic_0001>

<llo_original>
// kernel: tpu_custom_call.1
$region0: #{tpu_custom_call.1}
  #allocation0 [shape = 'u32[]', space=smem, size = 0x4, offset = 0x4, fixed_abs, tag = 'smem constant byte address 0x4 - core index']
  #allocation1 [shape = 'u32[72,128]{1,0:T(1,128)}', space=vmem, size = 0x9000, scoped, tag = 'internal scratch']
  %s0 = inlined_call_operand.vmem [shape: f32[24,128], index: 0, kind: input, shape index: {}]
  %s1 = inlined_call_operand.vmem [shape: f32[8,128,32], index: 1, kind: input, shape index: {}]
  %s2 = inlined_call_operand.vmem [shape: f32[312,128], index: 2, kind: input, shape index: {}]
  %s3 = inlined_call_operand.hbm [shape: f32[8,384], index: 3, kind: output, shape index: {}]
  %s4 = sld [smem:[#allocation0]]
  $region22: #{tpu_custom_call.1} parent=0
    _
  %s6 = ssub.s32 1, %s4
  %s7 = scalar_select 0, %s6, %s4
  $region1: #{tpu_custom_call.1} parent=0
    #allocation2 [shape = 'u8[12288]{0}', space=vmem, size = 0x3000, scoped, tag = 'output window, operand 0, single buffered']
    #allocation3 [shape = 's32[1]{0}', space=sflag, size = 0x4, scoped, tag = 'scoped memory for tpu_custom_call.1']
    %8 = vsyncpa [#allocation3], 0
    // Predicated region
    $region2: #{tpu_custom_call.1} parent=1 // pred_check
      _
    $region3: #{tpu_custom_call.1} parent=1 // pred_check_branch
      %10 = sbr.rel (0) target = $region5
    $region4: #{tpu_custom_call.1} parent=1 // pred_region
      _
    $region5: #{tpu_custom_call.1} parent=1 // pred_fallthru
      _
    // Predicated region
    $region6: #{tpu_custom_call.1} parent=1 // pred_check
      _
    $region7: #{tpu_custom_call.1} parent=1 // pred_check_branch
      %12 = sbr.rel (0) target = $region9
    $region8: #{tpu_custom_call.1} parent=1 // pred_region
      _
    $region9: #{tpu_custom_call.1} parent=1 // pred_fallthru
      _
    // Predicated region
    $region10: #{tpu_custom_call.1} parent=1 // pred_check
      _
    $region11: #{tpu_custom_call.1} parent=1 // pred_check_branch
      %14 = sbr.rel (0) target = $region13
    $region12: #{tpu_custom_call.1} parent=1 // pred_region
      _
    $region13: #{tpu_custom_call.1} parent=1 // pred_fallthru
      _
    %v15 = vld [vmem:[%s0] sm:$0xff]
    %v16 = vld [vmem:[%s0 + $0x8] sm:$0xff]
    %v17 = vld [vmem:[%s0 + $0x10] sm:$0xff]
    %v18 = vld [vmem:[%s2] sm:$0xff]
    %v19 = vld [vmem:[%s2 + $0x8] sm:$0xff]
    %v20 = vld [vmem:[%s2 + $0x10] sm:$0xff]
    %v21 = vld [vmem:[%s2 + $0x18] sm:$0xff]
    %v22 = vld [vmem:[%s2 + $0x20] sm:$0xff]
    %v23 = vld [vmem:[%s2 + $0x28] sm:$0xff]
    %v24 = vld [vmem:[%s2 + $0x30] sm:$0xff]
    %v25 = vld [vmem:[%s2 + $0x38] sm:$0xff]
    %v26 = vld [vmem:[%s2 + $0x40] sm:$0xff]
    %v27 = vld [vmem:[%s2 + $0x48] sm:$0xff]
    %v28 = vld [vmem:[%s2 + $0x50] sm:$0xff]
    %v29 = vld [vmem:[%s2 + $0x58] sm:$0xff]
    %v30 = vld [vmem:[%s2 + $0x60] sm:$0xff]
    %v31 = vld [vmem:[%s2 + $0x68] sm:$0xff]
    %v32 = vld [vmem:[%s2 + $0x70] sm:$0xff]
    %v33 = vld [vmem:[%s2 + $0x78] sm:$0xff]
    %v34 = vld [vmem:[%s2 + $0x80] sm:$0xff]
    %35 = vmatpush.msra.mxu0 %v33
    %36 = vmatpush.msra.mxu0 %v32
    %37 = vmatpush.msra.mxu0 %v31
    %38 = vmatpush.msra.mxu0 %v30
    %39 = vmatpush.msra.mxu0 %v29
    %40 = vmatpush.msra.mxu0 %v28
    %41 = vmatpush.msra.mxu0 %v27
    %42 = vmatpush.msra.mxu0 %v26
    %43 = vmatpush.msra.mxu0 %v25
    %44 = vmatpush.msra.mxu0 %v24
    %45 = vmatpush.msra.mxu0 %v23
    %46 = vmatpush.msra.mxu0 %v22
    %47 = vmatpush.msra.mxu0 %v21
    %48 = vmatpush.msra.mxu0 %v20
    %49 = vmatpush.msra.mxu0 %v19
    %50 = vmatpush.msra.mxu0 %v18
    %51 = vmatmul.f32.gmra.mxu0 %v15
    %v52 = vpop.f32.mrf.mxu0
    %v53 = vadd.f32 %v34, %v52
    %54 = vdwg.mxu0
    %v55 = vadd.f32 %v53, %v16
    %56 = vmax.xlane.f32.xlu0 %v55
    %v57 = vpop.xlane.xlu0 %56
    %v58 = vlaneseq
    %v59 = vand.u32 %v58, 127
    %vm60 = vcmp.ge.f32.partialorder %v55, %v57
    %v61 = vsel %vm60, %v59, 128
    %v62 = vand.u32 %v61, 65535
    %v63 = vshra.s32 %v61, 16
    %v64 = vcvt.s32.f32 %v62
    %v65 = vcvt.s32.f32 %v63
    %66 = vmin.xlane.f32.xlu0 %v65
    %v67 = vpop.xlane.xlu0 %66
    %vm68 = vcmp.eq.f32.partialorder %v65, %v67
    %v69 = vsel %vm68, %v64, inf
    %70 = vmin.xlane.f32.xlu0 %v69
    %v71 = vpop.xlane.xlu0 %70
    %v72 = vcvt.f32.s32 %v71
    %v73 = vcvt.f32.s32 %v67
    %v74 = vshll.u32 %v73, 16
    %v75 = vadd.s32 %v74, %v72
    %vm76 = vcmp.eq.s32.totalorder %v59, %v75
    %v77 = vsel %vm76, 1, 0
    %v78 = vcvt.s32.f32 %v77
    %v79 = vld [vmem:[%s1] sm:$0xff]
    %v80 = vld [vmem:[%s1 + $0x8] sm:$0xff]
    %v81 = vld [vmem:[%s1 + $0x10] sm:$0xff]
    %v82 = vld [vmem:[%s1 + $0x18] sm:$0xff]
    %v83 = vld [vmem:[%s1 + $0x20] sm:$0xff]
    %v84 = vld [vmem:[%s1 + $0x28] sm:$0xff]
    %v85 = vld [vmem:[%s1 + $0x30] sm:$0xff]
    %v86 = vld [vmem:[%s1 + $0x38] sm:$0xff]
    %v87 = vld [vmem:[%s1 + $0x40] sm:$0xff]
    %v88 = vld [vmem:[%s1 + $0x48] sm:$0xff]
    %v89 = vld [vmem:[%s1 + $0x50] sm:$0xff]
    %v90 = vld [vmem:[%s1 + $0x58] sm:$0xff]
    %v91 = vld [vmem:[%s1 + $0x60] sm:$0xff]
    %v92 = vld [vmem:[%s1 + $0x68] sm:$0xff]
    %v93 = vld [vmem:[%s1 + $0x70] sm:$0xff]
    %v94 = vld [vmem:[%s1 + $0x78] sm:$0xff]
    %v95 = vld [vmem:[%s1 + $0x80] sm:$0xff]
    %v96 = vld [vmem:[%s1 + $0x88] sm:$0xff]
    %v97 = vld [vmem:[%s1 + $0x90] sm:$0xff]
    %v98 = vld [vmem:[%s1 + $0x98] sm:$0xff]
    %v99 = vld [vmem:[%s1 + $0xa0] sm:$0xff]
    %v100 = vld [vmem:[%s1 + $0xa8] sm:$0xff]
    %v101 = vld [vmem:[%s1 + $0xb0] sm:$0xff]
    %v102 = vld [vmem:[%s1 + $0xb8] sm:$0xff]
    %v103 = vld [vmem:[%s1 + $0xc0] sm:$0xff]
    %v104 = vld [vmem:[%s1 + $0xc8] sm:$0xff]
    %v105 = vld [vmem:[%s1 + $0xd0] sm:$0xff]
    %v106 = vld [vmem:[%s1 + $0xd8] sm:$0xff]
    %v107 = vld [vmem:[%s1 + $0xe0] sm:$0xff]
    %v108 = vld [vmem:[%s1 + $0xe8] sm:$0xff]
    %v109 = vld [vmem:[%s1 + $0xf0] sm:$0xff]
    %v110 = vld [vmem:[%s1 + $0xf8] sm:$0xff]
    %v111 = vld [vmem:[%s1 + $0x100] sm:$0xff]
    %v112 = vld [vmem:[%s1 + $0x108] sm:$0xff]
    %v113 = vld [vmem:[%s1 + $0x110] sm:$0xff]
    %v114 = vld [vmem:[%s1 + $0x118] sm:$0xff]
    %v115 = vld [vmem:[%s1 + $0x120] sm:$0xff]
    %v116 = vld [vmem:[%s1 + $0x128] sm:$0xff]
    %v117 = vld [vmem:[%s1 + $0x130] sm:$0xff]
    %v118 = vld [vmem:[%s1 + $0x138] sm:$0xff]
    %v119 = vld [vmem:[%s1 + $0x140] sm:$0xff]
    %v120 = vld [vmem:[%s1 + $0x148] sm:$0xff]
    %v121 = vld [vmem:[%s1 + $0x150] sm:$0xff]
    %v122 = vld [vmem:[%s1 + $0x158] sm:$0xff]
    %v123 = vld [vmem:[%s1 + $0x160] sm:$0xff]
    %v124 = vld [vmem:[%s1 + $0x168] sm:$0xff]
    %v125 = vld [vmem:[%s1 + $0x170] sm:$0xff]
    %v126 = vld [vmem:[%s1 + $0x178] sm:$0xff]
    %v127 = vld [vmem:[%s1 + $0x180] sm:$0xff]
    %v128 = vld [vmem:[%s1 + $0x188] sm:$0xff]
    %v129 = vld [vmem:[%s1 + $0x190] sm:$0xff]
    %v130 = vld [vmem:[%s1 + $0x198] sm:$0xff]
    %v131 = vld [vmem:[%s1 + $0x1a0] sm:$0xff]
    %v132 = vld [vmem:[%s1 + $0x1a8] sm:$0xff]
    %v133 = vld [vmem:[%s1 + $0x1b0] sm:$0xff]
    %v134 = vld [vmem:[%s1 + $0x1b8] sm:$0xff]
    %v135 = vld [vmem:[%s1 + $0x1c0] sm:$0xff]
    %v136 = vld [vmem:[%s1 + $0x1c8] sm:$0xff]
    %v137 = vld [vmem:[%s1 + $0x1d0] sm:$0xff]
    %v138 = vld [vmem:[%s1 + $0x1d8] sm:$0xff]
    %v139 = vld [vmem:[%s1 + $0x1e0] sm:$0xff]
    %v140 = vld [vmem:[%s1 + $0x1e8] sm:$0xff]
    %v141 = vld [vmem:[%s1 + $0x1f0] sm:$0xff]
    %v142 = vld [vmem:[%s1 + $0x1f8] sm:$0xff]
    %v143 = vld [vmem:[%s1 + $0x200] sm:$0xff]
    %v144 = vld [vmem:[%s1 + $0x208] sm:$0xff]
    %v145 = vld [vmem:[%s1 + $0x210] sm:$0xff]
    %v146 = vld [vmem:[%s1 + $0x218] sm:$0xff]
    %v147 = vld [vmem:[%s1 + $0x220] sm:$0xff]
    %v148 = vld [vmem:[%s1 + $0x228] sm:$0xff]
    %v149 = vld [vmem:[%s1 + $0x230] sm:$0xff]
    %v150 = vld [vmem:[%s1 + $0x238] sm:$0xff]
    %v151 = vld [vmem:[%s1 + $0x240] sm:$0xff]
    %v152 = vld [vmem:[%s1 + $0x248] sm:$0xff]
    %v153 = vld [vmem:[%s1 + $0x250] sm:$0xff]
    %v154 = vld [vmem:[%s1 + $0x258] sm:$0xff]
    %v155 = vld [vmem:[%s1 + $0x260] sm:$0xff]
    %v156 = vld [vmem:[%s1 + $0x268] sm:$0xff]
    %v157 = vld [vmem:[%s1 + $0x270] sm:$0xff]
    %v158 = vld [vmem:[%s1 + $0x278] sm:$0xff]
    %v159 = vld [vmem:[%s1 + $0x280] sm:$0xff]
    %v160 = vld [vmem:[%s1 + $0x288] sm:$0xff]
    %v161 = vld [vmem:[%s1 + $0x290] sm:$0xff]
    %v162 = vld [vmem:[%s1 + $0x298] sm:$0xff]
    %v163 = vld [vmem:[%s1 + $0x2a0] sm:$0xff]
    %v164 = vld [vmem:[%s1 + $0x2a8] sm:$0xff]
    %v165 = vld [vmem:[%s1 + $0x2b0] sm:$0xff]
    %v166 = vld [vmem:[%s1 + $0x2b8] sm:$0xff]
    %v167 = vld [vmem:[%s1 + $0x2c0] sm:$0xff]
    %v168 = vld [vmem:[%s1 + $0x2c8] sm:$0xff]
    %v169 = vld [vmem:[%s1 + $0x2d0] sm:$0xff]
    %v170 = vld [vmem:[%s1 + $0x2d8] sm:$0xff]
    %v171 = vld [vmem:[%s1 + $0x2e0] sm:$0xff]
    %v172 = vld [vmem:[%s1 + $0x2e8] sm:$0xff]
    %v173 = vld [vmem:[%s1 + $0x2f0] sm:$0xff]
    %v174 = vld [vmem:[%s1 + $0x2f8] sm:$0xff]
    %v175 = vld [vmem:[%s1 + $0x300] sm:$0xff]
    %v176 = vld [vmem:[%s1 + $0x308] sm:$0xff]
    %v177 = vld [vmem:[%s1 + $0x310] sm:$0xff]
    %v178 = vld [vmem:[%s1 + $0x318] sm:$0xff]
    %v179 = vld [vmem:[%s1 + $0x320] sm:$0xff]
    %v180 = vld [vmem:[%s1 + $0x328] sm:$0xff]
    %v181 = vld [vmem:[%s1 + $0x330] sm:$0xff]
    %v182 = vld [vmem:[%s1 + $0x338] sm:$0xff]
    %v183 = vld [vmem:[%s1 + $0x340] sm:$0xff]
    %v184 = vld [vmem:[%s1 + $0x348] sm:$0xff]
    %v185 = vld [vmem:[%s1 + $0x350] sm:$0xff]
    %v186 = vld [vmem:[%s1 + $0x358] sm:$0xff]
    %v187 = vld [vmem:[%s1 + $0x360] sm:$0xff]
    %v188 = vld [vmem:[%s1 + $0x368] sm:$0xff]
    %v189 = vld [vmem:[%s1 + $0x370] sm:$0xff]
    %v190 = vld [vmem:[%s1 + $0x378] sm:$0xff]
    %v191 = vld [vmem:[%s1 + $0x380] sm:$0xff]
    %v192 = vld [vmem:[%s1 + $0x388] sm:$0xff]
    %v193 = vld [vmem:[%s1 + $0x390] sm:$0xff]
    %v194 = vld [vmem:[%s1 + $0x398] sm:$0xff]
    %v195 = vld [vmem:[%s1 + $0x3a0] sm:$0xff]
    %v196 = vld [vmem:[%s1 + $0x3a8] sm:$0xff]
    %v197 = vld [vmem:[%s1 + $0x3b0] sm:$0xff]
    %v198 = vld [vmem:[%s1 + $0x3b8] sm:$0xff]
    %v199 = vld [vmem:[%s1 + $0x3c0] sm:$0xff]
    %v200 = vld [vmem:[%s1 + $0x3c8] sm:$0xff]
    %v201 = vld [vmem:[%s1 + $0x3d0] sm:$0xff]
    %v202 = vld [vmem:[%s1 + $0x3d8] sm:$0xff]
    %v203 = vld [vmem:[%s1 + $0x3e0] sm:$0xff]
    %v204 = vld [vmem:[%s1 + $0x3e8] sm:$0xff]
    %v205 = vld [vmem:[%s1 + $0x3f0] sm:$0xff]
    %v206 = vld [vmem:[%s1 + $0x3f8] sm:$0xff]
    %v207 = vperm.slane %v78, 0
    %v208 = vlaneseq
    %v209 = vshrl.u32 %v208, 7
    %211 = vset.pattern.permute.xlu0 %v209
    %212 = vperm.xlu0 %211, %v207
    %v213 = vpop.permute.xlu0 %212
    %v214 = vlaneseq
    %v215 = vshrl.u32 %v214, 7
    %v216 = vadd.s32 %v215, 8
    %217 = vset.pattern.permute.xlu0 %v216
    %218 = vperm.xlu0 %217, %v207
    %v219 = vpop.permute.xlu0 %218
    %v220 = vlaneseq
    %v221 = vshrl.u32 %v220, 7
    %v222 = vadd.s32 %v221, 16
    %223 = vset.pattern.permute.xlu0 %v222
    %224 = vperm.xlu0 %223, %v207
    %v225 = vpop.permute.xlu0 %224
    %v226 = vlaneseq
    %v227 = vshrl.u32 %v226, 7
    %v228 = vadd.s32 %v227, 24
    %229 = vset.pattern.permute.xlu0 %v228
    %230 = vperm.xlu0 %229, %v207
    %v231 = vpop.permute.xlu0 %230
    %v232 = vlaneseq
    %v233 = vshrl.u32 %v232, 7
    %v234 = vadd.s32 %v233, 32
    %235 = vset.pattern.permute.xlu0 %v234
    %236 = vperm.xlu0 %235, %v207
    %v237 = vpop.permute.xlu0 %236
    %v238 = vlaneseq
    %v239 = vshrl.u32 %v238, 7
    %v240 = vadd.s32 %v239, 40
    %241 = vset.pattern.permute.xlu0 %v240
    %242 = vperm.xlu0 %241, %v207
    %v243 = vpop.permute.xlu0 %242
    %v244 = vlaneseq
    %v245 = vshrl.u32 %v244, 7
    %v246 = vadd.s32 %v245, 48
    %247 = vset.pattern.permute.xlu0 %v246
    %248 = vperm.xlu0 %247, %v207
    %v249 = vpop.permute.xlu0 %248
    %v250 = vlaneseq
    %v251 = vshrl.u32 %v250, 7
    %v252 = vadd.s32 %v251, 56
    %253 = vset.pattern.permute.xlu0 %v252
    %254 = vperm.xlu0 %253, %v207
    %v255 = vpop.permute.xlu0 %254
    %v256 = vlaneseq
    %v257 = vshrl.u32 %v256, 7
    %v258 = vadd.s32 %v257, 64
    %259 = vset.pattern.permute.xlu0 %v258
    %260 = vperm.xlu0 %259, %v207
    %v261 = vpop.permute.xlu0 %260
    %v262 = vlaneseq
    %v263 = vshrl.u32 %v262, 7
    %v264 = vadd.s32 %v263, 72
    %265 = vset.pattern.permute.xlu0 %v264
    %266 = vperm.xlu0 %265, %v207
    %v267 = vpop.permute.xlu0 %266
    %v268 = vlaneseq
    %v269 = vshrl.u32 %v268, 7
    %v270 = vadd.s32 %v269, 80
    %271 = vset.pattern.permute.xlu0 %v270
    %272 = vperm.xlu0 %271, %v207
    %v273 = vpop.permute.xlu0 %272
    %v274 = vlaneseq
    %v275 = vshrl.u32 %v274, 7
    %v276 = vadd.s32 %v275, 88
    %277 = vset.pattern.permute.xlu0 %v276
    %278 = vperm.xlu0 %277, %v207
    %v279 = vpop.permute.xlu0 %278
    %v280 = vlaneseq
    %v281 = vshrl.u32 %v280, 7
    %v282 = vadd.s32 %v281, 96
    %283 = vset.pattern.permute.xlu0 %v282
    %284 = vperm.xlu0 %283, %v207
    %v285 = vpop.permute.xlu0 %284
    %v286 = vlaneseq
    %v287 = vshrl.u32 %v286, 7
    %v288 = vadd.s32 %v287, 104
    %289 = vset.pattern.permute.xlu0 %v288
    %290 = vperm.xlu0 %289, %v207
    %v291 = vpop.permute.xlu0 %290
    %v292 = vlaneseq
    %v293 = vshrl.u32 %v292, 7
    %v294 = vadd.s32 %v293, 112
    %295 = vset.pattern.permute.xlu0 %v294
    %296 = vperm.xlu0 %295, %v207
    %v297 = vpop.permute.xlu0 %296
    %v298 = vlaneseq
    %v299 = vshrl.u32 %v298, 7
    %v300 = vadd.s32 %v299, 120
    %301 = vset.pattern.permute.xlu0 %v300
    %302 = vperm.xlu0 %301, %v207
    %v303 = vpop.permute.xlu0 %302
    %v304 = vperm.slane %v78, 1
    %v305 = vlaneseq
    %v306 = vshrl.u32 %v305, 7
    %308 = vset.pattern.permute.xlu0 %v306
    %309 = vperm.xlu0 %308, %v304
    %v310 = vpop.permute.xlu0 %309
    %v311 = vlaneseq
    %v312 = vshrl.u32 %v311, 7
    %v313 = vadd.s32 %v312, 8
    %314 = vset.pattern.permute.xlu0 %v313
    %315 = vperm.xlu0 %314, %v304
    %v316 = vpop.permute.xlu0 %315
    %v317 = vlaneseq
    %v318 = vshrl.u32 %v317, 7
    %v319 = vadd.s32 %v318, 16
    %320 = vset.pattern.permute.xlu0 %v319
    %321 = vperm.xlu0 %320, %v304
    %v322 = vpop.permute.xlu0 %321
    %v323 = vlaneseq
    %v324 = vshrl.u32 %v323, 7
    %v325 = vadd.s32 %v324, 24
    %326 = vset.pattern.permute.xlu0 %v325
    %327 = vperm.xlu0 %326, %v304
    %v328 = vpop.permute.xlu0 %327
    %v329 = vlaneseq
    %v330 = vshrl.u32 %v329, 7
    %v331 = vadd.s32 %v330, 32
    %332 = vset.pattern.permute.xlu0 %v331
    %333 = vperm.xlu0 %332, %v304
    %v334 = vpop.permute.xlu0 %333
    %v335 = vlaneseq
    %v336 = vshrl.u32 %v335, 7
    %v337 = vadd.s32 %v336, 40
    %338 = vset.pattern.permute.xlu0 %v337
    %339 = vperm.xlu0 %338, %v304
    %v340 = vpop.permute.xlu0 %339
    %v341 = vlaneseq
    %v342 = vshrl.u32 %v341, 7
    %v343 = vadd.s32 %v342, 48
    %344 = vset.pattern.permute.xlu0 %v343
    %345 = vperm.xlu0 %344, %v304
    %v346 = vpop.permute.xlu0 %345
    %v347 = vlaneseq
    %v348 = vshrl.u32 %v347, 7
    %v349 = vadd.s32 %v348, 56
    %350 = vset.pattern.permute.xlu0 %v349
    %351 = vperm.xlu0 %350, %v304
    %v352 = vpop.permute.xlu0 %351
    %v353 = vlaneseq
    %v354 = vshrl.u32 %v353, 7
    %v355 = vadd.s32 %v354, 64
    %356 = vset.pattern.permute.xlu0 %v355
    %357 = vperm.xlu0 %356, %v304
    %v358 = vpop.permute.xlu0 %357
    %v359 = vlaneseq
    %v360 = vshrl.u32 %v359, 7
    %v361 = vadd.s32 %v360, 72
    %362 = vset.pattern.permute.xlu0 %v361
    %363 = vperm.xlu0 %362, %v304
    %v364 = vpop.permute.xlu0 %363
    %v365 = vlaneseq
    %v366 = vshrl.u32 %v365, 7
    %v367 = vadd.s32 %v366, 80
    %368 = vset.pattern.permute.xlu0 %v367
    %369 = vperm.xlu0 %368, %v304
    %v370 = vpop.permute.xlu0 %369
    %v371 = vlaneseq
    %v372 = vshrl.u32 %v371, 7
    %v373 = vadd.s32 %v372, 88
    %374 = vset.pattern.permute.xlu0 %v373
    %375 = vperm.xlu0 %374, %v304
    %v376 = vpop.permute.xlu0 %375
    %v377 = vlaneseq
    %v378 = vshrl.u32 %v377, 7
    %v379 = vadd.s32 %v378, 96
    %380 = vset.pattern.permute.xlu0 %v379
    %381 = vperm.xlu0 %380, %v304
    %v382 = vpop.permute.xlu0 %381
    %v383 = vlaneseq
    %v384 = vshrl.u32 %v383, 7
    %v385 = vadd.s32 %v384, 104
    %386 = vset.pattern.permute.xlu0 %v385
    %387 = vperm.xlu0 %386, %v304
    %v388 = vpop.permute.xlu0 %387
    %v389 = vlaneseq
    %v390 = vshrl.u32 %v389, 7
    %v391 = vadd.s32 %v390, 112
    %392 = vset.pattern.permute.xlu0 %v391
    %393 = vperm.xlu0 %392, %v304
    %v394 = vpop.permute.xlu0 %393
    %v395 = vlaneseq
    %v396 = vshrl.u32 %v395, 7
    %v397 = vadd.s32 %v396, 120
    %398 = vset.pattern.permute.xlu0 %v397
    %399 = vperm.xlu0 %398, %v304
    %v400 = vpop.permute.xlu0 %399
    %v401 = vperm.slane %v78, 2
    %v402 = vlaneseq
    %v403 = vshrl.u32 %v402, 7
    %405 = vset.pattern.permute.xlu0 %v403
    %406 = vperm.xlu0 %405, %v401
    %v407 = vpop.permute.xlu0 %406
    %v408 = vlaneseq
    %v409 = vshrl.u32 %v408, 7
    %v410 = vadd.s32 %v409, 8
    %411 = vset.pattern.permute.xlu0 %v410
    %412 = vperm.xlu0 %411, %v401
    %v413 = vpop.permute.xlu0 %412
    %v414 = vlaneseq
    %v415 = vshrl.u32 %v414, 7
    %v416 = vadd.s32 %v415, 16
    %417 = vset.pattern.permute.xlu0 %v416
    %418 = vperm.xlu0 %417, %v401
    %v419 = vpop.permute.xlu0 %418
    %v420 = vlaneseq
    %v421 = vshrl.u32 %v420, 7
    %v422 = vadd.s32 %v421, 24
    %423 = vset.pattern.permute.xlu0 %v422
    %424 = vperm.xlu0 %423, %v401
    %v425 = vpop.permute.xlu0 %424
    %v426 = vlaneseq
    %v427 = vshrl.u32 %v426, 7
    %v428 = vadd.s32 %v427, 32
    %429 = vset.pattern.permute.xlu0 %v428
    %430 = vperm.xlu0 %429, %v401
    %v431 = vpop.permute.xlu0 %430
    %v432 = vlaneseq
    %v433 = vshrl.u32 %v432, 7
    %v434 = vadd.s32 %v433, 40
    %435 = vset.pattern.permute.xlu0 %v434
    %436 = vperm.xlu0 %435, %v401
    %v437 = vpop.permute.xlu0 %436
    %v438 = vlaneseq
    %v439 = vshrl.u32 %v438, 7
    %v440 = vadd.s32 %v439, 48
    %441 = vset.pattern.permute.xlu0 %v440
    %442 = vperm.xlu0 %441, %v401
    %v443 = vpop.permute.xlu0 %442
    %v444 = vlaneseq
    %v445 = vshrl.u32 %v444, 7
    %v446 = vadd.s32 %v445, 56
    %447 = vset.pattern.permute.xlu0 %v446
    %448 = vperm.xlu0 %447, %v401
    %v449 = vpop.permute.xlu0 %448
    %v450 = vlaneseq
    %v451 = vshrl.u32 %v450, 7
    %v452 = vadd.s32 %v451, 64
    %453 = vset.pattern.permute.xlu0 %v452
    %454 = vperm.xlu0 %453, %v401
    %v455 = vpop.permute.xlu0 %454
    %v456 = vlaneseq
    %v457 = vshrl.u32 %v456, 7
    %v458 = vadd.s32 %v457, 72
    %459 = vset.pattern.permute.xlu0 %v458
    %460 = vperm.xlu0 %459, %v401
    %v461 = vpop.permute.xlu0 %460
    %v462 = vlaneseq
    %v463 = vshrl.u32 %v462, 7
    %v464 = vadd.s32 %v463, 80
    %465 = vset.pattern.permute.xlu0 %v464
    %466 = vperm.xlu0 %465, %v401
    %v467 = vpop.permute.xlu0 %466
    %v468 = vlaneseq
    %v469 = vshrl.u32 %v468, 7
    %v470 = vadd.s32 %v469, 88
    %471 = vset.pattern.permute.xlu0 %v470
    %472 = vperm.xlu0 %471, %v401
    %v473 = vpop.permute.xlu0 %472
    %v474 = vlaneseq
    %v475 = vshrl.u32 %v474, 7
    %v476 = vadd.s32 %v475, 96
    %477 = vset.pattern.permute.xlu0 %v476
    %478 = vperm.xlu0 %477, %v401
    %v479 = vpop.permute.xlu0 %478
    %v480 = vlaneseq
    %v481 = vshrl.u32 %v480, 7
    %v482 = vadd.s32 %v481, 104
    %483 = vset.pattern.permute.xlu0 %v482
    %484 = vperm.xlu0 %483, %v401
    %v485 = vpop.permute.xlu0 %484
    %v486 = vlaneseq
    %v487 = vshrl.u32 %v486, 7
    %v488 = vadd.s32 %v487, 112
    %489 = vset.pattern.permute.xlu0 %v488
    %490 = vperm.xlu0 %489, %v401
    %v491 = vpop.permute.xlu0 %490
    %v492 = vlaneseq
    %v493 = vshrl.u32 %v492, 7
    %v494 = vadd.s32 %v493, 120
    %495 = vset.pattern.permute.xlu0 %v494
    %496 = vperm.xlu0 %495, %v401
    %v497 = vpop.permute.xlu0 %496
    %v498 = vperm.slane %v78, 3
    %v499 = vlaneseq
    %v500 = vshrl.u32 %v499, 7
    %502 = vset.pattern.permute.xlu0 %v500
    %503 = vperm.xlu0 %502, %v498
    %v504 = vpop.permute.xlu0 %503
    %v505 = vlaneseq
    %v506 = vshrl.u32 %v505, 7
    %v507 = vadd.s32 %v506, 8
    %508 = vset.pattern.permute.xlu0 %v507
    %509 = vperm.xlu0 %508, %v498
    %v510 = vpop.permute.xlu0 %509
    %v511 = vlaneseq
    %v512 = vshrl.u32 %v511, 7
    %v513 = vadd.s32 %v512, 16
    %514 = vset.pattern.permute.xlu0 %v513
    %515 = vperm.xlu0 %514, %v498
    %v516 = vpop.permute.xlu0 %515
    %v517 = vlaneseq
    %v518 = vshrl.u32 %v517, 7
    %v519 = vadd.s32 %v518, 24
    %520 = vset.pattern.permute.xlu0 %v519
    %521 = vperm.xlu0 %520, %v498
    %v522 = vpop.permute.xlu0 %521
    %v523 = vlaneseq
    %v524 = vshrl.u32 %v523, 7
    %v525 = vadd.s32 %v524, 32
    %526 = vset.pattern.permute.xlu0 %v525
    %527 = vperm.xlu0 %526, %v498
    %v528 = vpop.permute.xlu0 %527
    %v529 = vlaneseq
    %v530 = vshrl.u32 %v529, 7
    %v531 = vadd.s32 %v530, 40
    %532 = vset.pattern.permute.xlu0 %v531
    %533 = vperm.xlu0 %532, %v498
    %v534 = vpop.permute.xlu0 %533
    %v535 = vlaneseq
    %v536 = vshrl.u32 %v535, 7
    %v537 = vadd.s32 %v536, 48
    %538 = vset.pattern.permute.xlu0 %v537
    %539 = vperm.xlu0 %538, %v498
    %v540 = vpop.permute.xlu0 %539
    %v541 = vlaneseq
    %v542 = vshrl.u32 %v541, 7
    %v543 = vadd.s32 %v542, 56
    %544 = vset.pattern.permute.xlu0 %v543
    %545 = vperm.xlu0 %544, %v498
    %v546 = vpop.permute.xlu0 %545
    %v547 = vlaneseq
    %v548 = vshrl.u32 %v547, 7
    %v549 = vadd.s32 %v548, 64
    %550 = vset.pattern.permute.xlu0 %v549
    %551 = vperm.xlu0 %550, %v498
    %v552 = vpop.permute.xlu0 %551
    %v553 = vlaneseq
    %v554 = vshrl.u32 %v553, 7
    %v555 = vadd.s32 %v554, 72
    %556 = vset.pattern.permute.xlu0 %v555
    %557 = vperm.xlu0 %556, %v498
    %v558 = vpop.permute.xlu0 %557
    %v559 = vlaneseq
    %v560 = vshrl.u32 %v559, 7
    %v561 = vadd.s32 %v560, 80
    %562 = vset.pattern.permute.xlu0 %v561
    %563 = vperm.xlu0 %562, %v498
    %v564 = vpop.permute.xlu0 %563
    %v565 = vlaneseq
    %v566 = vshrl.u32 %v565, 7
    %v567 = vadd.s32 %v566, 88
    %568 = vset.pattern.permute.xlu0 %v567
    %569 = vperm.xlu0 %568, %v498
    %v570 = vpop.permute.xlu0 %569
    %v571 = vlaneseq
    %v572 = vshrl.u32 %v571, 7
    %v573 = vadd.s32 %v572, 96
    %574 = vset.pattern.permute.xlu0 %v573
    %575 = vperm.xlu0 %574, %v498
    %v576 = vpop.permute.xlu0 %575
    %v577 = vlaneseq
    %v578 = vshrl.u32 %v577, 7
    %v579 = vadd.s32 %v578, 104
    %580 = vset.pattern.permute.xlu0 %v579
    %581 = vperm.xlu0 %580, %v498
    %v582 = vpop.permute.xlu0 %581
    %v583 = vlaneseq
    %v584 = vshrl.u32 %v583, 7
    %v585 = vadd.s32 %v584, 112
    %586 = vset.pattern.permute.xlu0 %v585
    %587 = vperm.xlu0 %586, %v498
    %v588 = vpop.permute.xlu0 %587
    %v589 = vlaneseq
    %v590 = vshrl.u32 %v589, 7
    %v591 = vadd.s32 %v590, 120
    %592 = vset.pattern.permute.xlu0 %v591
    %593 = vperm.xlu0 %592, %v498
    %v594 = vpop.permute.xlu0 %593
    %v595 = vperm.slane %v78, 4
    %v596 = vlaneseq
    %v597 = vshrl.u32 %v596, 7
    %599 = vset.pattern.permute.xlu0 %v597
    %600 = vperm.xlu0 %599, %v595
    %v601 = vpop.permute.xlu0 %600
    %v602 = vlaneseq
    %v603 = vshrl.u32 %v602, 7
    %v604 = vadd.s32 %v603, 8
    %605 = vset.pattern.permute.xlu0 %v604
    %606 = vperm.xlu0 %605, %v595
    %v607 = vpop.permute.xlu0 %606
    %v608 = vlaneseq
    %v609 = vshrl.u32 %v608, 7
    %v610 = vadd.s32 %v609, 16
    %611 = vset.pattern.permute.xlu0 %v610
    %612 = vperm.xlu0 %611, %v595
    %v613 = vpop.permute.xlu0 %612
    %v614 = vlaneseq
    %v615 = vshrl.u32 %v614, 7
    %v616 = vadd.s32 %v615, 24
    %617 = vset.pattern.permute.xlu0 %v616
    %618 = vperm.xlu0 %617, %v595
    %v619 = vpop.permute.xlu0 %618
    %v620 = vlaneseq
    %v621 = vshrl.u32 %v620, 7
    %v622 = vadd.s32 %v621, 32
    %623 = vset.pattern.permute.xlu0 %v622
    %624 = vperm.xlu0 %623, %v595
    %v625 = vpop.permute.xlu0 %624
    %v626 = vlaneseq
    %v627 = vshrl.u32 %v626, 7
    %v628 = vadd.s32 %v627, 40
    %629 = vset.pattern.permute.xlu0 %v628
    %630 = vperm.xlu0 %629, %v595
    %v631 = vpop.permute.xlu0 %630
    %v632 = vlaneseq
    %v633 = vshrl.u32 %v632, 7
    %v634 = vadd.s32 %v633, 48
    %635 = vset.pattern.permute.xlu0 %v634
    %636 = vperm.xlu0 %635, %v595
    %v637 = vpop.permute.xlu0 %636
    %v638 = vlaneseq
    %v639 = vshrl.u32 %v638, 7
    %v640 = vadd.s32 %v639, 56
    %641 = vset.pattern.permute.xlu0 %v640
    %642 = vperm.xlu0 %641, %v595
    %v643 = vpop.permute.xlu0 %642
    %v644 = vlaneseq
    %v645 = vshrl.u32 %v644, 7
    %v646 = vadd.s32 %v645, 64
    %647 = vset.pattern.permute.xlu0 %v646
    %648 = vperm.xlu0 %647, %v595
    %v649 = vpop.permute.xlu0 %648
    %v650 = vlaneseq
    %v651 = vshrl.u32 %v650, 7
    %v652 = vadd.s32 %v651, 72
    %653 = vset.pattern.permute.xlu0 %v652
    %654 = vperm.xlu0 %653, %v595
    %v655 = vpop.permute.xlu0 %654
    %v656 = vlaneseq
    %v657 = vshrl.u32 %v656, 7
    %v658 = vadd.s32 %v657, 80
    %659 = vset.pattern.permute.xlu0 %v658
    %660 = vperm.xlu0 %659, %v595
    %v661 = vpop.permute.xlu0 %660
    %v662 = vlaneseq
    %v663 = vshrl.u32 %v662, 7
    %v664 = vadd.s32 %v663, 88
    %665 = vset.pattern.permute.xlu0 %v664
    %666 = vperm.xlu0 %665, %v595
    %v667 = vpop.permute.xlu0 %666
    %v668 = vlaneseq
    %v669 = vshrl.u32 %v668, 7
    %v670 = vadd.s32 %v669, 96
    %671 = vset.pattern.permute.xlu0 %v670
    %672 = vperm.xlu0 %671, %v595
    %v673 = vpop.permute.xlu0 %672
    %v674 = vlaneseq
    %v675 = vshrl.u32 %v674, 7
    %v676 = vadd.s32 %v675, 104
    %677 = vset.pattern.permute.xlu0 %v676
    %678 = vperm.xlu0 %677, %v595
    %v679 = vpop.permute.xlu0 %678
    %v680 = vlaneseq
    %v681 = vshrl.u32 %v680, 7
    %v682 = vadd.s32 %v681, 112
    %683 = vset.pattern.permute.xlu0 %v682
    %684 = vperm.xlu0 %683, %v595
    %v685 = vpop.permute.xlu0 %684
    %v686 = vlaneseq
    %v687 = vshrl.u32 %v686, 7
    %v688 = vadd.s32 %v687, 120
    %689 = vset.pattern.permute.xlu0 %v688
    %690 = vperm.xlu0 %689, %v595
    %v691 = vpop.permute.xlu0 %690
    %v692 = vperm.slane %v78, 5
    %v693 = vlaneseq
    %v694 = vshrl.u32 %v693, 7
    %696 = vset.pattern.permute.xlu0 %v694
    %697 = vperm.xlu0 %696, %v692
    %v698 = vpop.permute.xlu0 %697
    %v699 = vlaneseq
    %v700 = vshrl.u32 %v699, 7
    %v701 = vadd.s32 %v700, 8
    %702 = vset.pattern.permute.xlu0 %v701
    %703 = vperm.xlu0 %702, %v692
    %v704 = vpop.permute.xlu0 %703
    %v705 = vlaneseq
    %v706 = vshrl.u32 %v705, 7
    %v707 = vadd.s32 %v706, 16
    %708 = vset.pattern.permute.xlu0 %v707
    %709 = vperm.xlu0 %708, %v692
    %v710 = vpop.permute.xlu0 %709
    %v711 = vlaneseq
    %v712 = vshrl.u32 %v711, 7
    %v713 = vadd.s32 %v712, 24
    %714 = vset.pattern.permute.xlu0 %v713
    %715 = vperm.xlu0 %714, %v692
    %v716 = vpop.permute.xlu0 %715
    %v717 = vlaneseq
    %v718 = vshrl.u32 %v717, 7
    %v719 = vadd.s32 %v718, 32
    %720 = vset.pattern.permute.xlu0 %v719
    %721 = vperm.xlu0 %720, %v692
    %v722 = vpop.permute.xlu0 %721
    %v723 = vlaneseq
    %v724 = vshrl.u32 %v723, 7
    %v725 = vadd.s32 %v724, 40
    %726 = vset.pattern.permute.xlu0 %v725
    %727 = vperm.xlu0 %726, %v692
    %v728 = vpop.permute.xlu0 %727
    %v729 = vlaneseq
    %v730 = vshrl.u32 %v729, 7
    %v731 = vadd.s32 %v730, 48
    %732 = vset.pattern.permute.xlu0 %v731
    %733 = vperm.xlu0 %732, %v692
    %v734 = vpop.permute.xlu0 %733
    %v735 = vlaneseq
    %v736 = vshrl.u32 %v735, 7
    %v737 = vadd.s32 %v736, 56
    %738 = vset.pattern.permute.xlu0 %v737
    %739 = vperm.xlu0 %738, %v692
    %v740 = vpop.permute.xlu0 %739
    %v741 = vlaneseq
    %v742 = vshrl.u32 %v741, 7
    %v743 = vadd.s32 %v742, 64
    %744 = vset.pattern.permute.xlu0 %v743
    %745 = vperm.xlu0 %744, %v692
    %v746 = vpop.permute.xlu0 %745
    %v747 = vlaneseq
    %v748 = vshrl.u32 %v747, 7
    %v749 = vadd.s32 %v748, 72
    %750 = vset.pattern.permute.xlu0 %v749
    %751 = vperm.xlu0 %750, %v692
    %v752 = vpop.permute.xlu0 %751
    %v753 = vlaneseq
    %v754 = vshrl.u32 %v753, 7
    %v755 = vadd.s32 %v754, 80
    %756 = vset.pattern.permute.xlu0 %v755
    %757 = vperm.xlu0 %756, %v692
    %v758 = vpop.permute.xlu0 %757
    %v759 = vlaneseq
    %v760 = vshrl.u32 %v759, 7
    %v761 = vadd.s32 %v760, 88
    %762 = vset.pattern.permute.xlu0 %v761
    %763 = vperm.xlu0 %762, %v692
    %v764 = vpop.permute.xlu0 %763
    %v765 = vlaneseq
    %v766 = vshrl.u32 %v765, 7
    %v767 = vadd.s32 %v766, 96
    %768 = vset.pattern.permute.xlu0 %v767
    %769 = vperm.xlu0 %768, %v692
    %v770 = vpop.permute.xlu0 %769
    %v771 = vlaneseq
    %v772 = vshrl.u32 %v771, 7
    %v773 = vadd.s32 %v772, 104
    %774 = vset.pattern.permute.xlu0 %v773
    %775 = vperm.xlu0 %774, %v692
    %v776 = vpop.permute.xlu0 %775
    %v777 = vlaneseq
    %v778 = vshrl.u32 %v777, 7
    %v779 = vadd.s32 %v778, 112
    %780 = vset.pattern.permute.xlu0 %v779
    %781 = vperm.xlu0 %780, %v692
    %v782 = vpop.permute.xlu0 %781
    %v783 = vlaneseq
    %v784 = vshrl.u32 %v783, 7
    %v785 = vadd.s32 %v784, 120
    %786 = vset.pattern.permute.xlu0 %v785
    %787 = vperm.xlu0 %786, %v692
    %v788 = vpop.permute.xlu0 %787
    %v789 = vperm.slane %v78, 6
    %v790 = vlaneseq
    %v791 = vshrl.u32 %v790, 7
    %793 = vset.pattern.permute.xlu0 %v791
    %794 = vperm.xlu0 %793, %v789
    %v795 = vpop.permute.xlu0 %794
    %v796 = vlaneseq
    %v797 = vshrl.u32 %v796, 7
    %v798 = vadd.s32 %v797, 8
    %799 = vset.pattern.permute.xlu0 %v798
    %800 = vperm.xlu0 %799, %v789
    %v801 = vpop.permute.xlu0 %800
    %v802 = vlaneseq
    %v803 = vshrl.u32 %v802, 7
    %v804 = vadd.s32 %v803, 16
    %805 = vset.pattern.permute.xlu0 %v804
    %806 = vperm.xlu0 %805, %v789
    %v807 = vpop.permute.xlu0 %806
    %v808 = vlaneseq
    %v809 = vshrl.u32 %v808, 7
    %v810 = vadd.s32 %v809, 24
    %811 = vset.pattern.permute.xlu0 %v810
    %812 = vperm.xlu0 %811, %v789
    %v813 = vpop.permute.xlu0 %812
    %v814 = vlaneseq
    %v815 = vshrl.u32 %v814, 7
    %v816 = vadd.s32 %v815, 32
    %817 = vset.pattern.permute.xlu0 %v816
    %818 = vperm.xlu0 %817, %v789
    %v819 = vpop.permute.xlu0 %818
    %v820 = vlaneseq
    %v821 = vshrl.u32 %v820, 7
    %v822 = vadd.s32 %v821, 40
    %823 = vset.pattern.permute.xlu0 %v822
    %824 = vperm.xlu0 %823, %v789
    %v825 = vpop.permute.xlu0 %824
    %v826 = vlaneseq
    %v827 = vshrl.u32 %v826, 7
    %v828 = vadd.s32 %v827, 48
    %829 = vset.pattern.permute.xlu0 %v828
    %830 = vperm.xlu0 %829, %v789
    %v831 = vpop.permute.xlu0 %830
    %v832 = vlaneseq
    %v833 = vshrl.u32 %v832, 7
    %v834 = vadd.s32 %v833, 56
    %835 = vset.pattern.permute.xlu0 %v834
    %836 = vperm.xlu0 %835, %v789
    %v837 = vpop.permute.xlu0 %836
    %v838 = vlaneseq
    %v839 = vshrl.u32 %v838, 7
    %v840 = vadd.s32 %v839, 64
    %841 = vset.pattern.permute.xlu0 %v840
    %842 = vperm.xlu0 %841, %v789
    %v843 = vpop.permute.xlu0 %842
    %v844 = vlaneseq
    %v845 = vshrl.u32 %v844, 7
    %v846 = vadd.s32 %v845, 72
    %847 = vset.pattern.permute.xlu0 %v846
    %848 = vperm.xlu0 %847, %v789
    %v849 = vpop.permute.xlu0 %848
    %v850 = vlaneseq
    %v851 = vshrl.u32 %v850, 7
    %v852 = vadd.s32 %v851, 80
    %853 = vset.pattern.permute.xlu0 %v852
    %854 = vperm.xlu0 %853, %v789
    %v855 = vpop.permute.xlu0 %854
    %v856 = vlaneseq
    %v857 = vshrl.u32 %v856, 7
    %v858 = vadd.s32 %v857, 88
    %859 = vset.pattern.permute.xlu0 %v858
    %860 = vperm.xlu0 %859, %v789
    %v861 = vpop.permute.xlu0 %860
    %v862 = vlaneseq
    %v863 = vshrl.u32 %v862, 7
    %v864 = vadd.s32 %v863, 96
    %865 = vset.pattern.permute.xlu0 %v864
    %866 = vperm.xlu0 %865, %v789
    %v867 = vpop.permute.xlu0 %866
    %v868 = vlaneseq
    %v869 = vshrl.u32 %v868, 7
    %v870 = vadd.s32 %v869, 104
    %871 = vset.pattern.permute.xlu0 %v870
    %872 = vperm.xlu0 %871, %v789
    %v873 = vpop.permute.xlu0 %872
    %v874 = vlaneseq
    %v875 = vshrl.u32 %v874, 7
    %v876 = vadd.s32 %v875, 112
    %877 = vset.pattern.permute.xlu0 %v876
    %878 = vperm.xlu0 %877, %v789
    %v879 = vpop.permute.xlu0 %878
    %v880 = vlaneseq
    %v881 = vshrl.u32 %v880, 7
    %v882 = vadd.s32 %v881, 120
    %883 = vset.pattern.permute.xlu0 %v882
    %884 = vperm.xlu0 %883, %v789
    %v885 = vpop.permute.xlu0 %884
    %v886 = vperm.slane %v78, 7
    %v887 = vlaneseq
    %v888 = vshrl.u32 %v887, 7
    %890 = vset.pattern.permute.xlu0 %v888
    %891 = vperm.xlu0 %890, %v886
    %v892 = vpop.permute.xlu0 %891
    %v893 = vlaneseq
    %v894 = vshrl.u32 %v893, 7
    %v895 = vadd.s32 %v894, 8
    %896 = vset.pattern.permute.xlu0 %v895
    %897 = vperm.xlu0 %896, %v886
    %v898 = vpop.permute.xlu0 %897
    %v899 = vlaneseq
    %v900 = vshrl.u32 %v899, 7
    %v901 = vadd.s32 %v900, 16
    %902 = vset.pattern.permute.xlu0 %v901
    %903 = vperm.xlu0 %902, %v886
    %v904 = vpop.permute.xlu0 %903
    %v905 = vlaneseq
    %v906 = vshrl.u32 %v905, 7
    %v907 = vadd.s32 %v906, 24
    %908 = vset.pattern.permute.xlu0 %v907
    %909 = vperm.xlu0 %908, %v886
    %v910 = vpop.permute.xlu0 %909
    %v911 = vlaneseq
    %v912 = vshrl.u32 %v911, 7
    %v913 = vadd.s32 %v912, 32
    %914 = vset.pattern.permute.xlu0 %v913
    %915 = vperm.xlu0 %914, %v886
    %v916 = vpop.permute.xlu0 %915
    %v917 = vlaneseq
    %v918 = vshrl.u32 %v917, 7
    %v919 = vadd.s32 %v918, 40
    %920 = vset.pattern.permute.xlu0 %v919
    %921 = vperm.xlu0 %920, %v886
    %v922 = vpop.permute.xlu0 %921
    %v923 = vlaneseq
    %v924 = vshrl.u32 %v923, 7
    %v925 = vadd.s32 %v924, 48
    %926 = vset.pattern.permute.xlu0 %v925
    %927 = vperm.xlu0 %926, %v886
    %v928 = vpop.permute.xlu0 %927
    %v929 = vlaneseq
    %v930 = vshrl.u32 %v929, 7
    %v931 = vadd.s32 %v930, 56
    %932 = vset.pattern.permute.xlu0 %v931
    %933 = vperm.xlu0 %932, %v886
    %v934 = vpop.permute.xlu0 %933
    %v935 = vlaneseq
    %v936 = vshrl.u32 %v935, 7
    %v937 = vadd.s32 %v936, 64
    %938 = vset.pattern.permute.xlu0 %v937
    %939 = vperm.xlu0 %938, %v886
    %v940 = vpop.permute.xlu0 %939
    %v941 = vlaneseq
    %v942 = vshrl.u32 %v941, 7
    %v943 = vadd.s32 %v942, 72
    %944 = vset.pattern.permute.xlu0 %v943
    %945 = vperm.xlu0 %944, %v886
    %v946 = vpop.permute.xlu0 %945
    %v947 = vlaneseq
    %v948 = vshrl.u32 %v947, 7
    %v949 = vadd.s32 %v948, 80
    %950 = vset.pattern.permute.xlu0 %v949
    %951 = vperm.xlu0 %950, %v886
    %v952 = vpop.permute.xlu0 %951
    %v953 = vlaneseq
    %v954 = vshrl.u32 %v953, 7
    %v955 = vadd.s32 %v954, 88
    %956 = vset.pattern.permute.xlu0 %v955
    %957 = vperm.xlu0 %956, %v886
    %v958 = vpop.permute.xlu0 %957
    %v959 = vlaneseq
    %v960 = vshrl.u32 %v959, 7
    %v961 = vadd.s32 %v960, 96
    %962 = vset.pattern.permute.xlu0 %v961
    %963 = vperm.xlu0 %962, %v886
    %v964 = vpop.permute.xlu0 %963
    %v965 = vlaneseq
    %v966 = vshrl.u32 %v965, 7
    %v967 = vadd.s32 %v966, 104
    %968 = vset.pattern.permute.xlu0 %v967
    %969 = vperm.xlu0 %968, %v886
    %v970 = vpop.permute.xlu0 %969
    %v971 = vlaneseq
    %v972 = vshrl.u32 %v971, 7
    %v973 = vadd.s32 %v972, 112
    %974 = vset.pattern.permute.xlu0 %v973
    %975 = vperm.xlu0 %974, %v886
    %v976 = vpop.permute.xlu0 %975
    %v977 = vlaneseq
    %v978 = vshrl.u32 %v977, 7
    %v979 = vadd.s32 %v978, 120
    %980 = vset.pattern.permute.xlu0 %v979
    %981 = vperm.xlu0 %980, %v886
    %v982 = vpop.permute.xlu0 %981
    %v983 = vmul.f32 %v79, %v213
    %v984 = vmul.f32 %v80, %v219
    %v985 = vmul.f32 %v81, %v225
    %v986 = vmul.f32 %v82, %v231
    %v987 = vmul.f32 %v83, %v237
    %v988 = vmul.f32 %v84, %v243
    %v989 = vmul.f32 %v85, %v249
    %v990 = vmul.f32 %v86, %v255
    %v991 = vmul.f32 %v87, %v261
    %v992 = vmul.f32 %v88, %v267
    %v993 = vmul.f32 %v89, %v273
    %v994 = vmul.f32 %v90, %v279
    %v995 = vmul.f32 %v91, %v285
    %v996 = vmul.f32 %v92, %v291
    %v997 = vmul.f32 %v93, %v297
    %v998 = vmul.f32 %v94, %v303
    %v999 = vmul.f32 %v95, %v310
    %v1000 = vmul.f32 %v96, %v316
    %v1001 = vmul.f32 %v97, %v322
    %v1002 = vmul.f32 %v98, %v328
    %v1003 = vmul.f32 %v99, %v334
    %v1004 = vmul.f32 %v100, %v340
    %v1005 = vmul.f32 %v101, %v346
    %v1006 = vmul.f32 %v102, %v352
    %v1007 = vmul.f32 %v103, %v358
    %v1008 = vmul.f32 %v104, %v364
    %v1009 = vmul.f32 %v105, %v370
    %v1010 = vmul.f32 %v106, %v376
    %v1011 = vmul.f32 %v107, %v382
    %v1012 = vmul.f32 %v108, %v388
    %v1013 = vmul.f32 %v109, %v394
    %v1014 = vmul.f32 %v110, %v400
    %v1015 = vmul.f32 %v111, %v407
    %v1016 = vmul.f32 %v112, %v413
    %v1017 = vmul.f32 %v113, %v419
    %v1018 = vmul.f32 %v114, %v425
    %v1019 = vmul.f32 %v115, %v431
    %v1020 = vmul.f32 %v116, %v437
    %v1021 = vmul.f32 %v117, %v443
    %v1022 = vmul.f32 %v118, %v449
    %v1023 = vmul.f32 %v119, %v455
    %v1024 = vmul.f32 %v120, %v461
    %v1025 = vmul.f32 %v121, %v467
    %v1026 = vmul.f32 %v122, %v473
    %v1027 = vmul.f32 %v123, %v479
    %v1028 = vmul.f32 %v124, %v485
    %v1029 = vmul.f32 %v125, %v491
    %v1030 = vmul.f32 %v126, %v497
    %v1031 = vmul.f32 %v127, %v504
    %v1032 = vmul.f32 %v128, %v510
    %v1033 = vmul.f32 %v129, %v516
    %v1034 = vmul.f32 %v130, %v522
    %v1035 = vmul.f32 %v131, %v528
    %v1036 = vmul.f32 %v132, %v534
    %v1037 = vmul.f32 %v133, %v540
    %v1038 = vmul.f32 %v134, %v546
    %v1039 = vmul.f32 %v135, %v552
    %v1040 = vmul.f32 %v136, %v558
    %v1041 = vmul.f32 %v137, %v564
    %v1042 = vmul.f32 %v138, %v570
    %v1043 = vmul.f32 %v139, %v576
    %v1044 = vmul.f32 %v140, %v582
    %v1045 = vmul.f32 %v141, %v588
    %v1046 = vmul.f32 %v142, %v594
    %v1047 = vmul.f32 %v143, %v601
    %v1048 = vmul.f32 %v144, %v607
    %v1049 = vmul.f32 %v145, %v613
    %v1050 = vmul.f32 %v146, %v619
    %v1051 = vmul.f32 %v147, %v625
    %v1052 = vmul.f32 %v148, %v631
    %v1053 = vmul.f32 %v149, %v637
    %v1054 = vmul.f32 %v150, %v643
    %v1055 = vmul.f32 %v151, %v649
    %v1056 = vmul.f32 %v152, %v655
    %v1057 = vmul.f32 %v153, %v661
    %v1058 = vmul.f32 %v154, %v667
    %v1059 = vmul.f32 %v155, %v673
    %v1060 = vmul.f32 %v156, %v679
    %v1061 = vmul.f32 %v157, %v685
    %v1062 = vmul.f32 %v158, %v691
    %v1063 = vmul.f32 %v159, %v698
    %v1064 = vmul.f32 %v160, %v704
    %v1065 = vmul.f32 %v161, %v710
    %v1066 = vmul.f32 %v162, %v716
    %v1067 = vmul.f32 %v163, %v722
    %v1068 = vmul.f32 %v164, %v728
    %v1069 = vmul.f32 %v165, %v734
    %v1070 = vmul.f32 %v166, %v740
    %v1071 = vmul.f32 %v167, %v746
    %v1072 = vmul.f32 %v168, %v752
    %v1073 = vmul.f32 %v169, %v758
    %v1074 = vmul.f32 %v170, %v764
    %v1075 = vmul.f32 %v171, %v770
    %v1076 = vmul.f32 %v172, %v776
    %v1077 = vmul.f32 %v173, %v782
    %v1078 = vmul.f32 %v174, %v788
    %v1079 = vmul.f32 %v175, %v795
    %v1080 = vmul.f32 %v176, %v801
    %v1081 = vmul.f32 %v177, %v807
    %v1082 = vmul.f32 %v178, %v813
    %v1083 = vmul.f32 %v179, %v819
    %v1084 = vmul.f32 %v180, %v825
    %v1085 = vmul.f32 %v181, %v831
    %v1086 = vmul.f32 %v182, %v837
    %v1087 = vmul.f32 %v183, %v843
    %v1088 = vmul.f32 %v184, %v849
    %v1089 = vmul.f32 %v185, %v855
    %v1090 = vmul.f32 %v186, %v861
    %v1091 = vmul.f32 %v187, %v867
    %v1092 = vmul.f32 %v188, %v873
    %v1093 = vmul.f32 %v189, %v879
    %v1094 = vmul.f32 %v190, %v885
    %v1095 = vmul.f32 %v191, %v892
    %v1096 = vmul.f32 %v192, %v898
    %v1097 = vmul.f32 %v193, %v904
    %v1098 = vmul.f32 %v194, %v910
    %v1099 = vmul.f32 %v195, %v916
    %v1100 = vmul.f32 %v196, %v922
    %v1101 = vmul.f32 %v197, %v928
    %v1102 = vmul.f32 %v198, %v934
    %v1103 = vmul.f32 %v199, %v940
    %v1104 = vmul.f32 %v200, %v946
    %v1105 = vmul.f32 %v201, %v952
    %v1106 = vmul.f32 %v202, %v958
    %v1107 = vmul.f32 %v203, %v964
    %v1108 = vmul.f32 %v204, %v970
    %v1109 = vmul.f32 %v205, %v976
    %v1110 = vmul.f32 %v206, %v982
    %vm1111 = vcmask 261120
    %v1112 = vsel %vm1111, %v983, 0.0
    %v1113 = vsel %vm1111, %v984, 0.0
    %v1114 = vadd.f32 %v1112, %v1113
    %v1115 = vsel %vm1111, %v985, 0.0
    %v1116 = vadd.f32 %v1114, %v1115
    %v1117 = vsel %vm1111, %v986, 0.0
    %v1118 = vadd.f32 %v1116, %v1117
    %v1119 = vsel %vm1111, %v987, 0.0
    %v1120 = vadd.f32 %v1118, %v1119
    %v1121 = vsel %vm1111, %v988, 0.0
    %v1122 = vadd.f32 %v1120, %v1121
    %v1123 = vsel %vm1111, %v989, 0.0
    %v1124 = vadd.f32 %v1122, %v1123
    %v1125 = vsel %vm1111, %v990, 0.0
    %v1126 = vadd.f32 %v1124, %v1125
    %v1127 = vsel %vm1111, %v991, 0.0
    %v1128 = vadd.f32 %v1126, %v1127
    %v1129 = vsel %vm1111, %v992, 0.0
    %v1130 = vadd.f32 %v1128, %v1129
    %v1131 = vsel %vm1111, %v993, 0.0
    %v1132 = vadd.f32 %v1130, %v1131
    %v1133 = vsel %vm1111, %v994, 0.0
    %v1134 = vadd.f32 %v1132, %v1133
    %v1135 = vsel %vm1111, %v995, 0.0
    %v1136 = vadd.f32 %v1134, %v1135
    %v1137 = vsel %vm1111, %v996, 0.0
    %v1138 = vadd.f32 %v1136, %v1137
    %v1139 = vsel %vm1111, %v997, 0.0
    %v1140 = vadd.f32 %v1138, %v1139
    %v1141 = vsel %vm1111, %v998, 0.0
    %v1142 = vadd.f32 %v1140, %v1141
    %v1143 = vrot.slane %v1142, 4
    %v1144 = vadd.f32 %v1142, %v1143
    %v1145 = vrot.slane %v1144, 2
    %v1146 = vadd.f32 %v1144, %v1145
    %v1147 = vrot.slane %v1146, 1
    %v1148 = vadd.f32 %v1146, %v1147
    %v1149 = vsel %vm1111, %v999, 0.0
    %v1150 = vsel %vm1111, %v1000, 0.0
    %v1151 = vadd.f32 %v1149, %v1150
    %v1152 = vsel %vm1111, %v1001, 0.0
    %v1153 = vadd.f32 %v1151, %v1152
    %v1154 = vsel %vm1111, %v1002, 0.0
    %v1155 = vadd.f32 %v1153, %v1154
    %v1156 = vsel %vm1111, %v1003, 0.0
    %v1157 = vadd.f32 %v1155, %v1156
    %v1158 = vsel %vm1111, %v1004, 0.0
    %v1159 = vadd.f32 %v1157, %v1158
    %v1160 = vsel %vm1111, %v1005, 0.0
    %v1161 = vadd.f32 %v1159, %v1160
    %v1162 = vsel %vm1111, %v1006, 0.0
    %v1163 = vadd.f32 %v1161, %v1162
    %v1164 = vsel %vm1111, %v1007, 0.0
    %v1165 = vadd.f32 %v1163, %v1164
    %v1166 = vsel %vm1111, %v1008, 0.0
    %v1167 = vadd.f32 %v1165, %v1166
    %v1168 = vsel %vm1111, %v1009, 0.0
    %v1169 = vadd.f32 %v1167, %v1168
    %v1170 = vsel %vm1111, %v1010, 0.0
    %v1171 = vadd.f32 %v1169, %v1170
    %v1172 = vsel %vm1111, %v1011, 0.0
    %v1173 = vadd.f32 %v1171, %v1172
    %v1174 = vsel %vm1111, %v1012, 0.0
    %v1175 = vadd.f32 %v1173, %v1174
    %v1176 = vsel %vm1111, %v1013, 0.0
    %v1177 = vadd.f32 %v1175, %v1176
    %v1178 = vsel %vm1111, %v1014, 0.0
    %v1179 = vadd.f32 %v1177, %v1178
    %v1180 = vrot.slane %v1179, 4
    %v1181 = vadd.f32 %v1179, %v1180
    %v1182 = vrot.slane %v1181, 2
    %v1183 = vadd.f32 %v1181, %v1182
    %v1184 = vrot.slane %v1183, 1
    %v1185 = vadd.f32 %v1183, %v1184
    %v1186 = vsel %vm1111, %v1015, 0.0
    %v1187 = vsel %vm1111, %v1016, 0.0
    %v1188 = vadd.f32 %v1186, %v1187
    %v1189 = vsel %vm1111, %v1017, 0.0
    %v1190 = vadd.f32 %v1188, %v1189
    %v1191 = vsel %vm1111, %v1018, 0.0
    %v1192 = vadd.f32 %v1190, %v1191
    %v1193 = vsel %vm1111, %v1019, 0.0
    %v1194 = vadd.f32 %v1192, %v1193
    %v1195 = vsel %vm1111, %v1020, 0.0
    %v1196 = vadd.f32 %v1194, %v1195
    %v1197 = vsel %vm1111, %v1021, 0.0
    %v1198 = vadd.f32 %v1196, %v1197
    %v1199 = vsel %vm1111, %v1022, 0.0
    %v1200 = vadd.f32 %v1198, %v1199
    %v1201 = vsel %vm1111, %v1023, 0.0
    %v1202 = vadd.f32 %v1200, %v1201
    %v1203 = vsel %vm1111, %v1024, 0.0
    %v1204 = vadd.f32 %v1202, %v1203
    %v1205 = vsel %vm1111, %v1025, 0.0
    %v1206 = vadd.f32 %v1204, %v1205
    %v1207 = vsel %vm1111, %v1026, 0.0
    %v1208 = vadd.f32 %v1206, %v1207
    %v1209 = vsel %vm1111, %v1027, 0.0
    %v1210 = vadd.f32 %v1208, %v1209
    %v1211 = vsel %vm1111, %v1028, 0.0
    %v1212 = vadd.f32 %v1210, %v1211
    %v1213 = vsel %vm1111, %v1029, 0.0
    %v1214 = vadd.f32 %v1212, %v1213
    %v1215 = vsel %vm1111, %v1030, 0.0
    %v1216 = vadd.f32 %v1214, %v1215
    %v1217 = vrot.slane %v1216, 4
    %v1218 = vadd.f32 %v1216, %v1217
    %v1219 = vrot.slane %v1218, 2
    %v1220 = vadd.f32 %v1218, %v1219
    %v1221 = vrot.slane %v1220, 1
    %v1222 = vadd.f32 %v1220, %v1221
    %v1223 = vsel %vm1111, %v1031, 0.0
    %v1224 = vsel %vm1111, %v1032, 0.0
    %v1225 = vadd.f32 %v1223, %v1224
    %v1226 = vsel %vm1111, %v1033, 0.0
    %v1227 = vadd.f32 %v1225, %v1226
    %v1228 = vsel %vm1111, %v1034, 0.0
    %v1229 = vadd.f32 %v1227, %v1228
    %v1230 = vsel %vm1111, %v1035, 0.0
    %v1231 = vadd.f32 %v1229, %v1230
    %v1232 = vsel %vm1111, %v1036, 0.0
    %v1233 = vadd.f32 %v1231, %v1232
    %v1234 = vsel %vm1111, %v1037, 0.0
    %v1235 = vadd.f32 %v1233, %v1234
    %v1236 = vsel %vm1111, %v1038, 0.0
    %v1237 = vadd.f32 %v1235, %v1236
    %v1238 = vsel %vm1111, %v1039, 0.0
    %v1239 = vadd.f32 %v1237, %v1238
    %v1240 = vsel %vm1111, %v1040, 0.0
    %v1241 = vadd.f32 %v1239, %v1240
    %v1242 = vsel %vm1111, %v1041, 0.0
    %v1243 = vadd.f32 %v1241, %v1242
    %v1244 = vsel %vm1111, %v1042, 0.0
    %v1245 = vadd.f32 %v1243, %v1244
    %v1246 = vsel %vm1111, %v1043, 0.0
    %v1247 = vadd.f32 %v1245, %v1246
    %v1248 = vsel %vm1111, %v1044, 0.0
    %v1249 = vadd.f32 %v1247, %v1248
    %v1250 = vsel %vm1111, %v1045, 0.0
    %v1251 = vadd.f32 %v1249, %v1250
    %v1252 = vsel %vm1111, %v1046, 0.0
    %v1253 = vadd.f32 %v1251, %v1252
    %v1254 = vrot.slane %v1253, 4
    %v1255 = vadd.f32 %v1253, %v1254
    %v1256 = vrot.slane %v1255, 2
    %v1257 = vadd.f32 %v1255, %v1256
    %v1258 = vrot.slane %v1257, 1
    %v1259 = vadd.f32 %v1257, %v1258
    %v1260 = vsel %vm1111, %v1047, 0.0
    %v1261 = vsel %vm1111, %v1048, 0.0
    %v1262 = vadd.f32 %v1260, %v1261
    %v1263 = vsel %vm1111, %v1049, 0.0
    %v1264 = vadd.f32 %v1262, %v1263
    %v1265 = vsel %vm1111, %v1050, 0.0
    %v1266 = vadd.f32 %v1264, %v1265
    %v1267 = vsel %vm1111, %v1051, 0.0
    %v1268 = vadd.f32 %v1266, %v1267
    %v1269 = vsel %vm1111, %v1052, 0.0
    %v1270 = vadd.f32 %v1268, %v1269
    %v1271 = vsel %vm1111, %v1053, 0.0
    %v1272 = vadd.f32 %v1270, %v1271
    %v1273 = vsel %vm1111, %v1054, 0.0
    %v1274 = vadd.f32 %v1272, %v1273
    %v1275 = vsel %vm1111, %v1055, 0.0
    %v1276 = vadd.f32 %v1274, %v1275
    %v1277 = vsel %vm1111, %v1056, 0.0
    %v1278 = vadd.f32 %v1276, %v1277
    %v1279 = vsel %vm1111, %v1057, 0.0
    %v1280 = vadd.f32 %v1278, %v1279
    %v1281 = vsel %vm1111, %v1058, 0.0
    %v1282 = vadd.f32 %v1280, %v1281
    %v1283 = vsel %vm1111, %v1059, 0.0
    %v1284 = vadd.f32 %v1282, %v1283
    %v1285 = vsel %vm1111, %v1060, 0.0
    %v1286 = vadd.f32 %v1284, %v1285
    %v1287 = vsel %vm1111, %v1061, 0.0
    %v1288 = vadd.f32 %v1286, %v1287
    %v1289 = vsel %vm1111, %v1062, 0.0
    %v1290 = vadd.f32 %v1288, %v1289
    %v1291 = vrot.slane %v1290, 4
    %v1292 = vadd.f32 %v1290, %v1291
    %v1293 = vrot.slane %v1292, 2
    %v1294 = vadd.f32 %v1292, %v1293
    %v1295 = vrot.slane %v1294, 1
    %v1296 = vadd.f32 %v1294, %v1295
    %v1297 = vsel %vm1111, %v1063, 0.0
    %v1298 = vsel %vm1111, %v1064, 0.0
    %v1299 = vadd.f32 %v1297, %v1298
    %v1300 = vsel %vm1111, %v1065, 0.0
    %v1301 = vadd.f32 %v1299, %v1300
    %v1302 = vsel %vm1111, %v1066, 0.0
    %v1303 = vadd.f32 %v1301, %v1302
    %v1304 = vsel %vm1111, %v1067, 0.0
    %v1305 = vadd.f32 %v1303, %v1304
    %v1306 = vsel %vm1111, %v1068, 0.0
    %v1307 = vadd.f32 %v1305, %v1306
    %v1308 = vsel %vm1111, %v1069, 0.0
    %v1309 = vadd.f32 %v1307, %v1308
    %v1310 = vsel %vm1111, %v1070, 0.0
    %v1311 = vadd.f32 %v1309, %v1310
    %v1312 = vsel %vm1111, %v1071, 0.0
    %v1313 = vadd.f32 %v1311, %v1312
    %v1314 = vsel %vm1111, %v1072, 0.0
    %v1315 = vadd.f32 %v1313, %v1314
    %v1316 = vsel %vm1111, %v1073, 0.0
    %v1317 = vadd.f32 %v1315, %v1316
    %v1318 = vsel %vm1111, %v1074, 0.0
    %v1319 = vadd.f32 %v1317, %v1318
    %v1320 = vsel %vm1111, %v1075, 0.0
    %v1321 = vadd.f32 %v1319, %v1320
    %v1322 = vsel %vm1111, %v1076, 0.0
    %v1323 = vadd.f32 %v1321, %v1322
    %v1324 = vsel %vm1111, %v1077, 0.0
    %v1325 = vadd.f32 %v1323, %v1324
    %v1326 = vsel %vm1111, %v1078, 0.0
    %v1327 = vadd.f32 %v1325, %v1326
    %v1328 = vrot.slane %v1327, 4
    %v1329 = vadd.f32 %v1327, %v1328
    %v1330 = vrot.slane %v1329, 2
    %v1331 = vadd.f32 %v1329, %v1330
    %v1332 = vrot.slane %v1331, 1
    %v1333 = vadd.f32 %v1331, %v1332
    %v1334 = vsel %vm1111, %v1079, 0.0
    %v1335 = vsel %vm1111, %v1080, 0.0
    %v1336 = vadd.f32 %v1334, %v1335
    %v1337 = vsel %vm1111, %v1081, 0.0
    %v1338 = vadd.f32 %v1336, %v1337
    %v1339 = vsel %vm1111, %v1082, 0.0
    %v1340 = vadd.f32 %v1338, %v1339
    %v1341 = vsel %vm1111, %v1083, 0.0
    %v1342 = vadd.f32 %v1340, %v1341
    %v1343 = vsel %vm1111, %v1084, 0.0
    %v1344 = vadd.f32 %v1342, %v1343
    %v1345 = vsel %vm1111, %v1085, 0.0
    %v1346 = vadd.f32 %v1344, %v1345
    %v1347 = vsel %vm1111, %v1086, 0.0
    %v1348 = vadd.f32 %v1346, %v1347
    %v1349 = vsel %vm1111, %v1087, 0.0
    %v1350 = vadd.f32 %v1348, %v1349
    %v1351 = vsel %vm1111, %v1088, 0.0
    %v1352 = vadd.f32 %v1350, %v1351
    %v1353 = vsel %vm1111, %v1089, 0.0
    %v1354 = vadd.f32 %v1352, %v1353
    %v1355 = vsel %vm1111, %v1090, 0.0
    %v1356 = vadd.f32 %v1354, %v1355
    %v1357 = vsel %vm1111, %v1091, 0.0
    %v1358 = vadd.f32 %v1356, %v1357
    %v1359 = vsel %vm1111, %v1092, 0.0
    %v1360 = vadd.f32 %v1358, %v1359
    %v1361 = vsel %vm1111, %v1093, 0.0
    %v1362 = vadd.f32 %v1360, %v1361
    %v1363 = vsel %vm1111, %v1094, 0.0
    %v1364 = vadd.f32 %v1362, %v1363
    %v1365 = vrot.slane %v1364, 4
    %v1366 = vadd.f32 %v1364, %v1365
    %v1367 = vrot.slane %v1366, 2
    %v1368 = vadd.f32 %v1366, %v1367
    %v1369 = vrot.slane %v1368, 1
    %v1370 = vadd.f32 %v1368, %v1369
    %v1371 = vsel %vm1111, %v1095, 0.0
    %v1372 = vsel %vm1111, %v1096, 0.0
    %v1373 = vadd.f32 %v1371, %v1372
    %v1374 = vsel %vm1111, %v1097, 0.0
    %v1375 = vadd.f32 %v1373, %v1374
    %v1376 = vsel %vm1111, %v1098, 0.0
    %v1377 = vadd.f32 %v1375, %v1376
    %v1378 = vsel %vm1111, %v1099, 0.0
    %v1379 = vadd.f32 %v1377, %v1378
    %v1380 = vsel %vm1111, %v1100, 0.0
    %v1381 = vadd.f32 %v1379, %v1380
    %v1382 = vsel %vm1111, %v1101, 0.0
    %v1383 = vadd.f32 %v1381, %v1382
    %v1384 = vsel %vm1111, %v1102, 0.0
    %v1385 = vadd.f32 %v1383, %v1384
    %v1386 = vsel %vm1111, %v1103, 0.0
    %v1387 = vadd.f32 %v1385, %v1386
    %v1388 = vsel %vm1111, %v1104, 0.0
    %v1389 = vadd.f32 %v1387, %v1388
    %v1390 = vsel %vm1111, %v1105, 0.0
    %v1391 = vadd.f32 %v1389, %v1390
    %v1392 = vsel %vm1111, %v1106, 0.0
    %v1393 = vadd.f32 %v1391, %v1392
    %v1394 = vsel %vm1111, %v1107, 0.0
    %v1395 = vadd.f32 %v1393, %v1394
    %v1396 = vsel %vm1111, %v1108, 0.0
    %v1397 = vadd.f32 %v1395, %v1396
    %v1398 = vsel %vm1111, %v1109, 0.0
    %v1399 = vadd.f32 %v1397, %v1398
    %v1400 = vsel %vm1111, %v1110, 0.0
    %v1401 = vadd.f32 %v1399, %v1400
    %v1402 = vrot.slane %v1401, 4
    %v1403 = vadd.f32 %v1401, %v1402
    %v1404 = vrot.slane %v1403, 2
    %v1405 = vadd.f32 %v1403, %v1404
    %v1406 = vrot.slane %v1405, 1
    %v1407 = vadd.f32 %v1405, %v1406
    %v1408 = vld [vmem:[%s2 + $0x88] sm:$0xff]
    %v1409 = vld [vmem:[%s2 + $0x90] sm:$0xff]
    %v1410 = vld [vmem:[%s2 + $0x98] sm:$0xff]
    %v1411 = vld [vmem:[%s2 + $0xa0] sm:$0xff]
    %v1412 = vld [vmem:[%s2 + $0xa8] sm:$0xff]
    %vm1421 = vcmask 1041409
    %v1422 = vsel %vm1421, %v1185, %v1148
    %vm1423 = vcmask 1042434
    %v1424 = vsel %vm1423, %v1222, %v1422
    %vm1425 = vcmask 1043459
    %v1426 = vsel %vm1425, %v1259, %v1424
    %vm1427 = vcmask 1044484
    %v1428 = vsel %vm1427, %v1296, %v1426
    %vm1429 = vcmask 1045509
    %v1430 = vsel %vm1429, %v1333, %v1428
    %vm1431 = vcmask 1046534
    %v1432 = vsel %vm1431, %v1370, %v1430
    %vm1433 = vcmask 1047559
    %v1434 = vsel %vm1433, %v1407, %v1432
    %v1435 = vsel %vm1111, %v1434, 0
    %1437 = vmatpush.msra.mxu0 0.0
    %1438 = vmatpush.msra.mxu0 0.0
    %1439 = vmatpush.msra.mxu0 0.0
    %1440 = vmatpush.msra.mxu0 0.0
    %1441 = vmatpush.msra.mxu0 0.0
    %1442 = vmatpush.msra.mxu0 0.0
    %1443 = vmatpush.msra.mxu0 0.0
    %1444 = vmatpush.msra.mxu0 0.0
    %1445 = vmatpush.msra.mxu0 0.0
    %1446 = vmatpush.msra.mxu0 0.0
    %1447 = vmatpush.msra.mxu0 0.0
    %1448 = vmatpush.msra.mxu0 0.0
    %1449 = vmatpush.msra.mxu0 %v1411
    %1450 = vmatpush.msra.mxu0 %v1410
    %1451 = vmatpush.msra.mxu0 %v1409
    %1452 = vmatpush.msra.mxu0 %v1408
    %1453 = vmatmul.f32.gmra.mxu0 %v1435
    %v1454 = vpop.f32.mrf.mxu0
    %v1455 = vadd.f32 %v1412, %v1454
    %1456 = vdwg.mxu0
    %1457 = vadd.xlane.f32.xlu0 %v1455
    %v1458 = vpop.xlane.xlu0 %1457
    %v1459 = vmul.f32 %v1458, 0.03125
    %v1460 = vsub.f32 %v1455, %v1459
    %v1461 = vld [vmem:[%s2 + $0xb0] sm:$0xff]
    %v1462 = vld [vmem:[%s2 + $0xb8] sm:$0xff]
    %v1463 = vld [vmem:[%s2 + $0xc0] sm:$0xff]
    %v1464 = vld [vmem:[%s2 + $0xc8] sm:$0xff]
    %v1465 = vld [vmem:[%s2 + $0xd0] sm:$0xff]
    %v1466 = vld [vmem:[%s2 + $0xd8] sm:$0xff]
    %v1467 = vld [vmem:[%s2 + $0xe0] sm:$0xff]
    %v1468 = vld [vmem:[%s2 + $0xe8] sm:$0xff]
    %v1469 = vld [vmem:[%s2 + $0xf0] sm:$0xff]
    %v1470 = vld [vmem:[%s2 + $0xf8] sm:$0xff]
    %v1471 = vld [vmem:[%s2 + $0x100] sm:$0xff]
    %v1472 = vld [vmem:[%s2 + $0x108] sm:$0xff]
    %v1473 = vld [vmem:[%s2 + $0x110] sm:$0xff]
    %v1474 = vld [vmem:[%s2 + $0x118] sm:$0xff]
    %v1475 = vld [vmem:[%s2 + $0x120] sm:$0xff]
    %v1476 = vld [vmem:[%s2 + $0x128] sm:$0xff]
    %v1477 = vld [vmem:[%s2 + $0x130] sm:$0xff]
    %1478 = vmatpush.msra.mxu0 %v1476
    %1479 = vmatpush.msra.mxu0 %v1475
    %1480 = vmatpush.msra.mxu0 %v1474
    %1481 = vmatpush.msra.mxu0 %v1473
    %1482 = vmatpush.msra.mxu0 %v1472
    %1483 = vmatpush.msra.mxu0 %v1471
    %1484 = vmatpush.msra.mxu0 %v1470
    %1485 = vmatpush.msra.mxu0 %v1469
    %1486 = vmatpush.msra.mxu0 %v1468
    %1487 = vmatpush.msra.mxu0 %v1467
    %1488 = vmatpush.msra.mxu0 %v1466
    %1489 = vmatpush.msra.mxu0 %v1465
    %1490 = vmatpush.msra.mxu0 %v1464
    %1491 = vmatpush.msra.mxu0 %v1463
    %1492 = vmatpush.msra.mxu0 %v1462
    %1493 = vmatpush.msra.mxu0 %v1461
    %1494 = vmatmul.f32.gmra.mxu0 %v1460
    %v1495 = vpop.f32.mrf.mxu0
    %v1496 = vadd.f32 %v1477, %v1495
    %1497 = vdwg.mxu0
    %v1498 = vmul.f32 %v1496, %v17
    %v1499 = vadd.f32 %v15, %v1498
    %1500 = vst [vmem:[#allocation2] sm:$0xff] %v53
    %1501 = vst [vmem:[#allocation2 + $0x8] sm:$0xff] %v1499
    %v1502 = vcvt.s32.f32 %v75
    %1503 = vst [vmem:[#allocation2 + $0x10] sm:$0xff] %v1502
    // Predicated region
    $region14: #{tpu_custom_call.1} parent=1 // pred_check
      _
    $region15: #{tpu_custom_call.1} parent=1 // pred_check_branch
      %1505 = sbr.rel (0) target = $region17
    $region16: #{tpu_custom_call.1} parent=1 // pred_region
      %1507 = vsyncadd [#allocation3], 0
      %s1509 = sshll.u32 [#allocation2], 4
      %s1510 = int_to_ptr.vmem [resolvable:$true] %s1509
      %s1511 = sshll.u32 %s3, 4
      %s1512 = int_to_ptr.hbm [resolvable:$true] %s1511
      %1514 = dma.vmem_to_hbm [thread:$0]  %s1510, 384, %s1512, [#allocation3]
    $region17: #{tpu_custom_call.1} parent=1 // pred_fallthru
      _
    // Predicated region
    $region18: #{tpu_custom_call.1} parent=1 // pred_check
      _
    $region19: #{tpu_custom_call.1} parent=1 // pred_check_branch
      %1516 = sbr.rel (0) target = $region21
    $region20: #{tpu_custom_call.1} parent=1 // pred_region
      %1518 = dma.done [#allocation3], 384
    $region21: #{tpu_custom_call.1} parent=1 // pred_fallthru
      _
    %1519 = vsyncpa [#allocation3], 1

</llo_original>
